<compile_context>
chip_gen: v5e
topology: v5e:2x2
jax: 0.10.0
libtpu: 0.0.40
codegen_flags: <defaults>
</compile_context>

<pallas_src>
import jax
import jax.numpy as jnp
from jax.experimental import pallas as pl
from jax.experimental.pallas import tpu as pltpu


def _attention_kernel(q_ref, k_ref, v_ref, mask_ref,
                      wqt_ref, bq_ref, wkt_ref, bk_ref, wvt_ref, bv_ref,
                      out_ref, attn_ref):
    bt, s, d = q_ref.shape

    # Fold the batch tile into the M dimension for the projection matmuls
    # (fills the MXU instead of feeding it S rows at a time).
    q2 = q_ref[...].reshape(bt * s, d)   # bf16
    k2 = k_ref[...].reshape(bt * s, d)
    v2 = v_ref[...].reshape(bt * s, d)

    # nn.Linear: y = x @ W.T + b  -- W already transposed (and Wq/bq already
    # carry the 1/sqrt(d_model) softmax scale) in the wrapper.
    qp = (jnp.dot(q2, wqt_ref[...], preferred_element_type=jnp.float32)
          + bq_ref[...]).reshape(bt, s, d)
    kp = (jnp.dot(k2, wkt_ref[...], preferred_element_type=jnp.float32)
          + bk_ref[...]).reshape(bt, s, d)
    vp = (jnp.dot(v2, wvt_ref[...], preferred_element_type=jnp.float32)
          + bv_ref[...]).reshape(bt, s, d)

    # scores = Q @ K^T (scale already folded into Wq/bq); contract on D
    # directly -- no explicit transpose of K.
    scores = jnp.einsum("bqd,bkd->bqk",
                        qp.astype(jnp.bfloat16), kp.astype(jnp.bfloat16),
                        preferred_element_type=jnp.float32)

    # Additive mask (0 where kept, -1e30 where masked).
    scores = scores + mask_ref[...].astype(jnp.float32)

    # Softmax along last axis (f32 vector math; divide via EUP reciprocal).
    m = jnp.max(scores, axis=-1, keepdims=True)
    e = jnp.exp(scores - m)
    denom = jnp.sum(e, axis=-1, keepdims=True)
    weights = e * pl.reciprocal(denom, approx=True)

    # output = weights @ V
    out = jnp.einsum("bqk,bkd->bqd",
                     weights.astype(jnp.bfloat16), vp.astype(jnp.bfloat16),
                     preferred_element_type=jnp.float32)

    out_ref[...] = out.astype(out_ref.dtype)
    attn_ref[...] = weights.astype(attn_ref.dtype)


def single_head_attention(query, key, value, mask,
                          wq, bq, wk, bk, wv, bv, *, block_b=1):
    """query/key/value: (B, S, D) f32; mask: (B, S, S), nonzero = keep;
    weights: (D, D) PyTorch nn.Linear layout; biases: (D,).
    Returns (output (B,S,D) f32, attn_weights (B,S,S) f32)."""
    B, S, D = query.shape
    assert B % block_b == 0

    scale = 1.0 / (D ** 0.5)

    # One-time wrapper-side prep (outside the hot loop):
    #  - pre-transpose weights, fold softmax scale into the query projection,
    #  - cast MXU operands to bf16,
    #  - build the additive bf16 mask.
    wqt = (wq * scale).T.astype(jnp.bfloat16)
    wkt = wk.T.astype(jnp.bfloat16)
    wvt = wv.T.astype(jnp.bfloat16)
    bq2 = (bq * scale).reshape(1, D).astype(jnp.float32)
    bk2 = bk.reshape(1, D).astype(jnp.float32)
    bv2 = bv.reshape(1, D).astype(jnp.float32)
    add_mask = jnp.where(mask == 0, -1e30, 0.0).astype(jnp.bfloat16)
    q_b = query.astype(jnp.bfloat16)
    k_b = key.astype(jnp.bfloat16)
    v_b = value.astype(jnp.bfloat16)

    seq_spec = pl.BlockSpec((block_b, S, D), lambda b: (b, 0, 0))
    msk_spec = pl.BlockSpec((block_b, S, S), lambda b: (b, 0, 0))
    # Weights/biases: constant index_map -> resident across grid steps.
    # TODO(synk): if D grows large, single-buffer these and budget
    # vmem_limit_bytes accordingly (default double-buffering costs 2x).
    w_spec = pl.BlockSpec((D, D), lambda b: (0, 0))
    b_spec = pl.BlockSpec((1, D), lambda b: (0, 0))

    out, attn = pl.pallas_call(
        _attention_kernel,
        out_shape=(
            jax.ShapeDtypeStruct((B, S, D), jnp.float32),
            jax.ShapeDtypeStruct((B, S, S), jnp.float32),
        ),
        grid_spec=pltpu.PrefetchScalarGridSpec(
            num_scalar_prefetch=0,
            grid=(B // block_b,),
            in_specs=[seq_spec, seq_spec, seq_spec, msk_spec,
                      w_spec, b_spec, w_spec, b_spec, w_spec, b_spec],
            out_specs=[seq_spec, msk_spec],
        ),
        compiler_params=pltpu.CompilerParams(
            dimension_semantics=("parallel",),
            vmem_limit_bytes=32 * 1024 * 1024),
    )(q_b, k_b, v_b, add_mask, wqt, bq2, wkt, bk2, wvt, bv2)
    return out, attn


def _reference(query, key, value, mask, wq, bq, wk, bk, wv, bv):
    qp = query @ wq.T + bq
    kp = key @ wk.T + bk
    vp = value @ wv.T + bv
    scores = jnp.einsum("bqd,bkd->bqk", qp, kp) / (kp.shape[-1] ** 0.5)
    scores = jnp.where(mask == 0, -jnp.inf, scores)
    weights = jax.nn.softmax(scores, axis=-1)
    out = jnp.einsum("bqk,bkd->bqd", weights, vp)
    return out, weights


if __name__ == "__main__":
    # Small shapes consistent with the module (batch, seq, d_model); S and D
    # multiples of 128 keep all stores lane-dense.
    B, S, D = 4, 128, 128
    BLOCK_B = 2  # 2 batch elements per grid step -> M=256 rows per projection

    key0 = jax.random.PRNGKey(0)
    k_q, k_k, k_v, k_wq, k_bq, k_wk, k_bk, k_wv, k_bv = jax.random.split(key0, 9)

    query = jax.random.uniform(k_q, (B, S, D), dtype=jnp.float32)
    key_t = jax.random.uniform(k_k, (B, S, D), dtype=jnp.float32)
    value = jax.random.uniform(k_v, (B, S, D), dtype=jnp.float32)

    # Causal mask (nonzero = keep); no fully-masked rows.
    mask = jnp.broadcast_to(
        jnp.tril(jnp.ones((S, S), dtype=jnp.int32)), (B, S, S))

    bound = 1.0 / (D ** 0.5)  # PyTorch nn.Linear default init range
    wq = jax.random.uniform(k_wq, (D, D), minval=-bound, maxval=bound, dtype=jnp.float32)
    bq = jax.random.uniform(k_bq, (D,), minval=-bound, maxval=bound, dtype=jnp.float32)
    wk = jax.random.uniform(k_wk, (D, D), minval=-bound, maxval=bound, dtype=jnp.float32)
    bk = jax.random.uniform(k_bk, (D,), minval=-bound, maxval=bound, dtype=jnp.float32)
    wv = jax.random.uniform(k_wv, (D, D), minval=-bound, maxval=bound, dtype=jnp.float32)
    bv = jax.random.uniform(k_bv, (D,), minval=-bound, maxval=bound, dtype=jnp.float32)

    out, attn = single_head_attention(query, key_t, value, mask,
                                      wq, bq, wk, bk, wv, bv, block_b=BLOCK_B)
    jax.block_until_ready((out, attn))

    ref_out, ref_attn = _reference(query, key_t, value, mask,
                                   wq, bq, wk, bk, wv, bv)
    # bf16 MXU inputs (f32 accumulation) -> bf16-level tolerance vs f32 ref.
    assert jnp.allclose(out, ref_out, atol=2e-2, rtol=2e-2)
    assert jnp.allclose(attn, ref_attn, atol=2e-2, rtol=2e-2)

    print("KERNEL_OK")
</pallas_src>

<mosaic_0001>
module attributes {stable_mosaic.version = 11 : i64} {
  func.func @_attention_kernel(%arg0: i32, %arg1: memref<2x128x128xbf16, #tpu.memory_space<vmem>>, %arg2: memref<2x128x128xbf16, #tpu.memory_space<vmem>>, %arg3: memref<2x128x128xbf16, #tpu.memory_space<vmem>>, %arg4: memref<2x128x128xbf16, #tpu.memory_space<vmem>>, %arg5: memref<128x128xbf16, #tpu.memory_space<vmem>>, %arg6: memref<1x128xf32, #tpu.memory_space<vmem>>, %arg7: memref<128x128xbf16, #tpu.memory_space<vmem>>, %arg8: memref<1x128xf32, #tpu.memory_space<vmem>>, %arg9: memref<128x128xbf16, #tpu.memory_space<vmem>>, %arg10: memref<1x128xf32, #tpu.memory_space<vmem>>, %arg11: memref<2x128x128xf32, #tpu.memory_space<vmem>>, %arg12: memref<2x128x128xf32, #tpu.memory_space<vmem>>) attributes {dimension_semantics = [#tpu.dimension_semantics<parallel>], iteration_bounds = array<i64: 2>, scalar_prefetch = 0 : i64, scratch_operands = 0 : i64, tpu.core_type = #tpu.core_type<tc>, window_params = [{transform_indices = @transform_0, window_bounds = array<i64: 2, 128, 128>}, {transform_indices = @transform_1, window_bounds = array<i64: 2, 128, 128>}, {transform_indices = @transform_2, window_bounds = array<i64: 2, 128, 128>}, {transform_indices = @transform_3, window_bounds = array<i64: 2, 128, 128>}, {pipeline_mode = #tpu.pipeline_mode<synchronous>, transform_indices = @transform_4, window_bounds = array<i64: 128, 128>}, {pipeline_mode = #tpu.pipeline_mode<synchronous>, transform_indices = @transform_5, window_bounds = array<i64: 1, 128>}, {pipeline_mode = #tpu.pipeline_mode<synchronous>, transform_indices = @transform_6, window_bounds = array<i64: 128, 128>}, {pipeline_mode = #tpu.pipeline_mode<synchronous>, transform_indices = @transform_7, window_bounds = array<i64: 1, 128>}, {pipeline_mode = #tpu.pipeline_mode<synchronous>, transform_indices = @transform_8, window_bounds = array<i64: 128, 128>}, {pipeline_mode = #tpu.pipeline_mode<synchronous>, transform_indices = @transform_9, window_bounds = array<i64: 1, 128>}, {transform_indices = @transform_10, window_bounds = array<i64: 2, 128, 128>}, {transform_indices = @transform_11, window_bounds = array<i64: 2, 128, 128>}]} {
    %c0 = arith.constant 0 : index
    %c0_0 = arith.constant 0 : index
    %c0_1 = arith.constant 0 : index
    %0 = vector.load %arg1[%c0, %c0_0, %c0_1] : memref<2x128x128xbf16, #tpu.memory_space<vmem>>, vector<2x128x128xbf16>
    %1 = vector.shape_cast %0 : vector<2x128x128xbf16> to vector<256x128xbf16>
    %c0_2 = arith.constant 0 : index
    %c0_3 = arith.constant 0 : index
    %c0_4 = arith.constant 0 : index
    %2 = vector.load %arg2[%c0_2, %c0_3, %c0_4] : memref<2x128x128xbf16, #tpu.memory_space<vmem>>, vector<2x128x128xbf16>
    %3 = vector.shape_cast %2 : vector<2x128x128xbf16> to vector<256x128xbf16>
    %c0_5 = arith.constant 0 : index
    %c0_6 = arith.constant 0 : index
    %c0_7 = arith.constant 0 : index
    %4 = vector.load %arg3[%c0_5, %c0_6, %c0_7] : memref<2x128x128xbf16, #tpu.memory_space<vmem>>, vector<2x128x128xbf16>
    %5 = vector.shape_cast %4 : vector<2x128x128xbf16> to vector<256x128xbf16>
    %c0_8 = arith.constant 0 : index
    %c0_9 = arith.constant 0 : index
    %6 = vector.load %arg5[%c0_8, %c0_9] : memref<128x128xbf16, #tpu.memory_space<vmem>>, vector<128x128xbf16>
    %cst = arith.constant dense<0.000000e+00> : vector<256x128xf32>
    %7 = tpu.matmul %1, %6, %cst {dimension_numbers = #tpu.dot_dimension_numbers<[1], [0], [0], [1], [0, 0, 1, 1], [], []>} : vector<256x128xbf16>, vector<128x128xbf16>, vector<256x128xf32> -> vector<256x128xf32>
    %c0_10 = arith.constant 0 : index
    %c0_11 = arith.constant 0 : index
    %8 = vector.load %arg6[%c0_10, %c0_11] : memref<1x128xf32, #tpu.memory_space<vmem>>, vector<1x128xf32>
    %9 = vector.broadcast %8 : vector<1x128xf32> to vector<256x128xf32>
    %10 = arith.addf %7, %9 : vector<256x128xf32>
    %11 = vector.shape_cast %10 : vector<256x128xf32> to vector<2x128x128xf32>
    %c0_12 = arith.constant 0 : index
    %c0_13 = arith.constant 0 : index
    %12 = vector.load %arg7[%c0_12, %c0_13] : memref<128x128xbf16, #tpu.memory_space<vmem>>, vector<128x128xbf16>
    %cst_14 = arith.constant dense<0.000000e+00> : vector<256x128xf32>
    %13 = tpu.matmul %3, %12, %cst_14 {dimension_numbers = #tpu.dot_dimension_numbers<[1], [0], [0], [1], [0, 0, 1, 1], [], []>} : vector<256x128xbf16>, vector<128x128xbf16>, vector<256x128xf32> -> vector<256x128xf32>
    %c0_15 = arith.constant 0 : index
    %c0_16 = arith.constant 0 : index
    %14 = vector.load %arg8[%c0_15, %c0_16] : memref<1x128xf32, #tpu.memory_space<vmem>>, vector<1x128xf32>
    %15 = vector.broadcast %14 : vector<1x128xf32> to vector<256x128xf32>
    %16 = arith.addf %13, %15 : vector<256x128xf32>
    %17 = vector.shape_cast %16 : vector<256x128xf32> to vector<2x128x128xf32>
    %c0_17 = arith.constant 0 : index
    %c0_18 = arith.constant 0 : index
    %18 = vector.load %arg9[%c0_17, %c0_18] : memref<128x128xbf16, #tpu.memory_space<vmem>>, vector<128x128xbf16>
    %cst_19 = arith.constant dense<0.000000e+00> : vector<256x128xf32>
    %19 = tpu.matmul %5, %18, %cst_19 {dimension_numbers = #tpu.dot_dimension_numbers<[1], [0], [0], [1], [0, 0, 1, 1], [], []>} : vector<256x128xbf16>, vector<128x128xbf16>, vector<256x128xf32> -> vector<256x128xf32>
    %c0_20 = arith.constant 0 : index
    %c0_21 = arith.constant 0 : index
    %20 = vector.load %arg10[%c0_20, %c0_21] : memref<1x128xf32, #tpu.memory_space<vmem>>, vector<1x128xf32>
    %21 = vector.broadcast %20 : vector<1x128xf32> to vector<256x128xf32>
    %22 = arith.addf %19, %21 : vector<256x128xf32>
    %23 = vector.shape_cast %22 : vector<256x128xf32> to vector<2x128x128xf32>
    %24 = arith.truncf %11 : vector<2x128x128xf32> to vector<2x128x128xbf16>
    %25 = arith.truncf %17 : vector<2x128x128xf32> to vector<2x128x128xbf16>
    "tpu.trace_start"() <{level = 10 : i32, message = "bqd,bkd->bqk"}> : () -> ()
    %cst_22 = arith.constant dense<0.000000e+00> : vector<2x128x128xf32>
    %26 = tpu.matmul %24, %25, %cst_22 {dimension_numbers = #tpu.dot_dimension_numbers<[2], [2], [1], [1], [0, 0, 0, 1, 1, 1], [0], [0]>} : vector<2x128x128xbf16>, vector<2x128x128xbf16>, vector<2x128x128xf32> -> vector<2x128x128xf32>
    "tpu.trace_stop"() : () -> ()
    %c0_23 = arith.constant 0 : index
    %c0_24 = arith.constant 0 : index
    %c0_25 = arith.constant 0 : index
    %27 = vector.load %arg4[%c0_23, %c0_24, %c0_25] : memref<2x128x128xbf16, #tpu.memory_space<vmem>>, vector<2x128x128xbf16>
    %28 = arith.extf %27 : vector<2x128x128xbf16> to vector<2x128x128xf32>
    %29 = arith.addf %26, %28 : vector<2x128x128xf32>
    %cst_26 = arith.constant dense<0xFF800000> : vector<2x128xf32>
    %30 = vector.multi_reduction <maximumf>, %29, %cst_26 [2] : vector<2x128x128xf32> to vector<2x128xf32>
    %31 = vector.shape_cast %30 : vector<2x128xf32> to vector<2x128x1xf32>
    %32 = vector.broadcast %31 : vector<2x128x1xf32> to vector<2x128x128xf32>
    %33 = arith.subf %29, %32 : vector<2x128x128xf32>
    %34 = math.exp %33 : vector<2x128x128xf32>
    %cst_27 = arith.constant dense<0.000000e+00> : vector<2x128xf32>
    %35 = vector.multi_reduction <add>, %34, %cst_27 [2] : vector<2x128x128xf32> to vector<2x128xf32>
    %36 = vector.shape_cast %35 : vector<2x128xf32> to vector<2x128x1xf32>
    %37 = tpu.reciprocal %36 {approx = true} : vector<2x128x1xf32> -> vector<2x128x1xf32>
    %38 = vector.broadcast %37 : vector<2x128x1xf32> to vector<2x128x128xf32>
    %39 = arith.mulf %34, %38 : vector<2x128x128xf32>
    %40 = arith.truncf %39 : vector<2x128x128xf32> to vector<2x128x128xbf16>
    %41 = arith.truncf %23 : vector<2x128x128xf32> to vector<2x128x128xbf16>
    "tpu.trace_start"() <{level = 10 : i32, message = "bqk,bkd->bqd"}> : () -> ()
    %cst_28 = arith.constant dense<0.000000e+00> : vector<2x128x128xf32>
    %42 = tpu.matmul %40, %41, %cst_28 {dimension_numbers = #tpu.dot_dimension_numbers<[2], [1], [1], [2], [0, 0, 0, 1, 1, 2], [0], [0]>} : vector<2x128x128xbf16>, vector<2x128x128xbf16>, vector<2x128x128xf32> -> vector<2x128x128xf32>
    "tpu.trace_stop"() : () -> ()
    %c0_29 = arith.constant 0 : index
    %c0_30 = arith.constant 0 : index
    %c0_31 = arith.constant 0 : index
    %43 = vector.load %arg11[%c0_29, %c0_30, %c0_31] : memref<2x128x128xf32, #tpu.memory_space<vmem>>, vector<2x128x128xf32>
    tpu.vector_store %arg11[%c0_29, %c0_30, %c0_31], %42 {strides = array<i32>} : memref<2x128x128xf32, #tpu.memory_space<vmem>>, vector<2x128x128xf32>,
    %c0_32 = arith.constant 0 : index
    %c0_33 = arith.constant 0 : index
    %c0_34 = arith.constant 0 : index
    %44 = vector.load %arg12[%c0_32, %c0_33, %c0_34] : memref<2x128x128xf32, #tpu.memory_space<vmem>>, vector<2x128x128xf32>
    tpu.vector_store %arg12[%c0_32, %c0_33, %c0_34], %39 {strides = array<i32>} : memref<2x128x128xf32, #tpu.memory_space<vmem>>, vector<2x128x128xf32>,
    return
  }
  func.func @transform_0(%arg0: i32) -> (i32, i32, i32) {
    %c0_i32 = arith.constant 0 : i32
    %c0_i32_0 = arith.constant 0 : i32
    %c0_i32_1 = arith.constant 0 : i32
    return %arg0, %c0_i32, %c0_i32_0 : i32, i32, i32
  }
  func.func @transform_1(%arg0: i32) -> (i32, i32, i32) {
    %c0_i32 = arith.constant 0 : i32
    %c0_i32_0 = arith.constant 0 : i32
    %c0_i32_1 = arith.constant 0 : i32
    return %arg0, %c0_i32, %c0_i32_0 : i32, i32, i32
  }
  func.func @transform_2(%arg0: i32) -> (i32, i32, i32) {
    %c0_i32 = arith.constant 0 : i32
    %c0_i32_0 = arith.constant 0 : i32
    %c0_i32_1 = arith.constant 0 : i32
    return %arg0, %c0_i32, %c0_i32_0 : i32, i32, i32
  }
  func.func @transform_3(%arg0: i32) -> (i32, i32, i32) {
    %c0_i32 = arith.constant 0 : i32
    %c0_i32_0 = arith.constant 0 : i32
    %c0_i32_1 = arith.constant 0 : i32
    return %arg0, %c0_i32, %c0_i32_0 : i32, i32, i32
  }
  func.func @transform_4(%arg0: i32) -> (i32, i32) {
    %c0_i32 = arith.constant 0 : i32
    %c0_i32_0 = arith.constant 0 : i32
    %c0_i32_1 = arith.constant 0 : i32
    return %c0_i32, %c0_i32_0 : i32, i32
  }
  func.func @transform_5(%arg0: i32) -> (i32, i32) {
    %c0_i32 = arith.constant 0 : i32
    %c0_i32_0 = arith.constant 0 : i32
    %c0_i32_1 = arith.constant 0 : i32
    return %c0_i32, %c0_i32_0 : i32, i32
  }
  func.func @transform_6(%arg0: i32) -> (i32, i32) {
    %c0_i32 = arith.constant 0 : i32
    %c0_i32_0 = arith.constant 0 : i32
    %c0_i32_1 = arith.constant 0 : i32
    return %c0_i32, %c0_i32_0 : i32, i32
  }
  func.func @transform_7(%arg0: i32) -> (i32, i32) {
    %c0_i32 = arith.constant 0 : i32
    %c0_i32_0 = arith.constant 0 : i32
    %c0_i32_1 = arith.constant 0 : i32
    return %c0_i32, %c0_i32_0 : i32, i32
  }
  func.func @transform_8(%arg0: i32) -> (i32, i32) {
    %c0_i32 = arith.constant 0 : i32
    %c0_i32_0 = arith.constant 0 : i32
    %c0_i32_1 = arith.constant 0 : i32
    return %c0_i32, %c0_i32_0 : i32, i32
  }
  func.func @transform_9(%arg0: i32) -> (i32, i32) {
    %c0_i32 = arith.constant 0 : i32
    %c0_i32_0 = arith.constant 0 : i32
    %c0_i32_1 = arith.constant 0 : i32
    return %c0_i32, %c0_i32_0 : i32, i32
  }
  func.func @transform_10(%arg0: i32) -> (i32, i32, i32) {
    %c0_i32 = arith.constant 0 : i32
    %c0_i32_0 = arith.constant 0 : i32
    %c0_i32_1 = arith.constant 0 : i32
    return %arg0, %c0_i32, %c0_i32_0 : i32, i32, i32
  }
  func.func @transform_11(%arg0: i32) -> (i32, i32, i32) {
    %c0_i32 = arith.constant 0 : i32
    %c0_i32_0 = arith.constant 0 : i32
    %c0_i32_1 = arith.constant 0 : i32
    return %arg0, %c0_i32, %c0_i32_0 : i32, i32, i32
  }
}

</mosaic_0001>

<llo_original>
// kernel: tpu_custom_call.1
$region0: #{tpu_custom_call.1}
  #allocation0 [shape = 'u32[]', space=smem, size = 0x4, offset = 0x4, fixed_abs, tag = 'smem constant byte address 0x4 - core index']
  #allocation1 [shape = 'u32[72,128]{1,0:T(1,128)}', space=vmem, size = 0x9000, scoped, tag = 'internal scratch']
  %s0 = inlined_call_operand.hbm [shape: bf16[4,128,128], index: 0, kind: input, shape index: {}]
  %s1 = inlined_call_operand.hbm [shape: bf16[4,128,128], index: 1, kind: input, shape index: {}]
  %s2 = inlined_call_operand.hbm [shape: bf16[4,128,128], index: 2, kind: input, shape index: {}]
  %s3 = inlined_call_operand.hbm [shape: bf16[4,128,128], index: 3, kind: input, shape index: {}]
  %s4 = inlined_call_operand.hbm [shape: bf16[128,128], index: 4, kind: input, shape index: {}]
  %s5 = inlined_call_operand.vmem [shape: f32[1,128], index: 5, kind: input, shape index: {}]
  %s6 = inlined_call_operand.hbm [shape: bf16[128,128], index: 6, kind: input, shape index: {}]
  %s7 = inlined_call_operand.vmem [shape: f32[1,128], index: 7, kind: input, shape index: {}]
  %s8 = inlined_call_operand.hbm [shape: bf16[128,128], index: 8, kind: input, shape index: {}]
  %s9 = inlined_call_operand.vmem [shape: f32[1,128], index: 9, kind: input, shape index: {}]
  %s10 = inlined_call_operand.hbm [shape: f32[4,128,128], index: 10, kind: output, shape index: {0}]
  %s11 = inlined_call_operand.hbm [shape: f32[4,128,128], index: 11, kind: output, shape index: {1}]
  %12 = xla_tuple %s10, %s11
  %s13 = sld [smem:[#allocation0]]
  $region109: #{tpu_custom_call.1} parent=0
    _
  %s15 = ssub.s32 1, %s13
  %s16 = scalar_select 0, %s15, %s13
  $region1: #{tpu_custom_call.1} parent=0
    #allocation2 [shape = 'u8[131072]{0}', space=vmem, size = 0x20000, scoped, tag = 'input window, operand 0']
    #allocation3 [shape = 's32[2]{0}', space=sflag, size = 0x8, scoped, tag = 'scoped memory for tpu_custom_call.1']
    #allocation4 [shape = 's32[2]{0}', space=sflag, size = 0x8, scoped, tag = 'scoped memory for tpu_custom_call.1']
    #allocation5 [shape = 'u8[131072]{0}', space=vmem, size = 0x20000, scoped, tag = 'input window, operand 1']
    #allocation6 [shape = 's32[2]{0}', space=sflag, size = 0x8, scoped, tag = 'scoped memory for tpu_custom_call.1']
    #allocation7 [shape = 'u8[131072]{0}', space=vmem, size = 0x20000, scoped, tag = 'input window, operand 2']
    #allocation8 [shape = 'u8[131072]{0}', space=vmem, size = 0x20000, scoped, tag = 'input window, operand 3']
    #allocation9 [shape = 's32[2]{0}', space=sflag, size = 0x8, scoped, tag = 'scoped memory for tpu_custom_call.1']
    #allocation10 [shape = 'u8[32768]{0}', space=vmem, size = 0x8000, scoped, tag = 'input window, operand 4, single buffered']
    #allocation11 [shape = 'u8[32768]{0}', space=vmem, size = 0x8000, scoped, tag = 'input window, operand 6, single buffered']
    #allocation12 [shape = 's32[1]{0}', space=sflag, size = 0x4, scoped, tag = 'scoped memory for tpu_custom_call.1']
    #allocation13 [shape = 'u8[32768]{0}', space=vmem, size = 0x8000, scoped, tag = 'input window, operand 8, single buffered']
    #allocation14 [shape = 'u8[262144]{0}', space=vmem, size = 0x40000, scoped, tag = 'output window, operand 0']
    #allocation15 [shape = 'u8[262144]{0}', space=vmem, size = 0x40000, scoped, tag = 'output window, operand 1']
    #allocation16 [shape = 's32[2]{0}', space=sflag, size = 0x8, scoped, tag = 'scoped memory for tpu_custom_call.1']
    %17 = vsyncpa [#allocation3], 0
    %s18 = scalar_lea.sflag [#allocation3], 1
    %19 = vsyncpa %s18, 0
    %20 = vsyncpa [#allocation6], 0
    %s21 = scalar_lea.sflag [#allocation6], 1
    %22 = vsyncpa %s21, 0
    %23 = vsyncpa [#allocation9], 0
    %s24 = scalar_lea.sflag [#allocation9], 1
    %25 = vsyncpa %s24, 0
    %26 = vsyncpa [#allocation12], 0
    %27 = vsyncpa [#allocation4], 0
    %s28 = scalar_lea.sflag [#allocation4], 1
    %29 = vsyncpa %s28, 0
    %30 = vsyncpa [#allocation16], 0
    %s31 = scalar_lea.sflag [#allocation16], 1
    %32 = vsyncpa %s31, 0
    loop: start=0, step=1, limit=4
    $region2: #{tpu_custom_call.1} parent=1 // loop_pre_header
      _
    $region3: #{tpu_custom_call.1} parent=1 // loop_header
      %s34 = sphi 0, %s38
      %p35 = scmp.ge.s32.totalorder %s34, 4
      %s44 = sphi 0, %s46
      %s47 = sphi 0, %s44
      %s48 = sphi 0, %s47
      %s64 = sphi 0, %s48
      %s70 = sphi 0, %s72
      %s73 = sphi 0, %s70
      %s74 = sphi 0, %s73
      %s90 = sphi 0, %s74
      %s96 = sphi 0, %s98
      %s99 = sphi 0, %s96
      %s100 = sphi 0, %s99
      %s116 = sphi 0, %s100
      %s122 = sphi 0, %s124
      %s125 = sphi 0, %s122
      %s126 = sphi 0, %s125
      %s142 = sphi 0, %s126
      %s146 = sphi 0, %s146
      %s148 = sphi 0, %s146
      %s149 = sphi 0, %s148
      %s163 = sphi 0, %s149
      %s167 = sphi 0, %s167
      %s169 = sphi 0, %s167
      %s170 = sphi 0, %s169
      %s184 = sphi 0, %s170
      %s188 = sphi 0, %s188
      %s190 = sphi 0, %s188
      %s191 = sphi 0, %s190
      %s205 = sphi 0, %s191
      %s209 = sphi 0, %s209
      %s211 = sphi 0, %s209
      %s212 = sphi 0, %s211
      %s226 = sphi 0, %s212
      %s230 = sphi 0, %s230
      %s232 = sphi 0, %s230
      %s233 = sphi 0, %s232
      %s247 = sphi 0, %s233
      %s251 = sphi 0, %s251
      %s253 = sphi 0, %s251
      %s254 = sphi 0, %s253
      %s268 = sphi 0, %s254
      %s274 = sphi 0, %s276
      %s277 = sphi 0, %s274
      %s278 = sphi 0, %s277
      %s294 = sphi 0, %s278
      %s300 = sphi 0, %s302
      %s303 = sphi 0, %s300
      %s304 = sphi 0, %s303
      %s320 = sphi 0, %s304
    $region4: #{tpu_custom_call.1} parent=1 // loop_header_branch
      %37 = sbr.rel (%p35) target = $region8
    $region5: #{tpu_custom_call.1} parent=1 // loop_body
      %s39 = ssub.s32 %s34, 1
      %s40 = ssub.s32 %s34, 2
      %s41 = sadd.s32 %s34, 1
      %s42 = ssub.s32 %s34, %s41
      %p43 = scmp.eq.s32.totalorder %s42, 0
      %s45 = sadd.s32 %s44, 1
      %s46 = scalar_select %p43, %s44, %s45
      %p49 = pneg %p43
      %p50 = scmp.eq.s32.totalorder %s34, 1
      %p51 = por %p49, %p50
      %p52 = scmp.ne.s32.totalorder %s44, %s47
      %p53 = scmp.eq.s32.totalorder %s34, 0
      %p54 = por %p52, %p53
      %p55 = scmp.ne.s32.totalorder %s44, %s47
      %p56 = scmp.eq.s32.totalorder %s39, 1
      %p57 = por %p55, %p56
      %p58 = scmp.ne.s32.totalorder %s47, %s48
      %p59 = scmp.eq.s32.totalorder %s39, 0
      %p60 = por %p58, %p59
      %p61 = scmp.ne.s32.totalorder %s47, %s48
      %p62 = scmp.eq.s32.totalorder %s40, 1
      %p63 = por %p61, %p62
      %p65 = scmp.ne.s32.totalorder %s48, %s64
      %p66 = scmp.eq.s32.totalorder %s40, 0
      %p67 = por %p65, %p66
      %s68 = ssub.s32 %s34, %s41
      %p69 = scmp.eq.s32.totalorder %s68, 0
      %s71 = sadd.s32 %s70, 1
      %s72 = scalar_select %p69, %s70, %s71
      %p75 = pneg %p69
      %p76 = scmp.eq.s32.totalorder %s34, 1
      %p77 = por %p75, %p76
      %p78 = scmp.ne.s32.totalorder %s70, %s73
      %p79 = scmp.eq.s32.totalorder %s34, 0
      %p80 = por %p78, %p79
      %p81 = scmp.ne.s32.totalorder %s70, %s73
      %p82 = scmp.eq.s32.totalorder %s39, 1
      %p83 = por %p81, %p82
      %p84 = scmp.ne.s32.totalorder %s73, %s74
      %p85 = scmp.eq.s32.totalorder %s39, 0
      %p86 = por %p84, %p85
      %p87 = scmp.ne.s32.totalorder %s73, %s74
      %p88 = scmp.eq.s32.totalorder %s40, 1
      %p89 = por %p87, %p88
      %p91 = scmp.ne.s32.totalorder %s74, %s90
      %p92 = scmp.eq.s32.totalorder %s40, 0
      %p93 = por %p91, %p92
      %s94 = ssub.s32 %s34, %s41
      %p95 = scmp.eq.s32.totalorder %s94, 0
      %s97 = sadd.s32 %s96, 1
      %s98 = scalar_select %p95, %s96, %s97
      %p101 = pneg %p95
      %p102 = scmp.eq.s32.totalorder %s34, 1
      %p103 = por %p101, %p102
      %p104 = scmp.ne.s32.totalorder %s96, %s99
      %p105 = scmp.eq.s32.totalorder %s34, 0
      %p106 = por %p104, %p105
      %p107 = scmp.ne.s32.totalorder %s96, %s99
      %p108 = scmp.eq.s32.totalorder %s39, 1
      %p109 = por %p107, %p108
      %p110 = scmp.ne.s32.totalorder %s99, %s100
      %p111 = scmp.eq.s32.totalorder %s39, 0
      %p112 = por %p110, %p111
      %p113 = scmp.ne.s32.totalorder %s99, %s100
      %p114 = scmp.eq.s32.totalorder %s40, 1
      %p115 = por %p113, %p114
      %p117 = scmp.ne.s32.totalorder %s100, %s116
      %p118 = scmp.eq.s32.totalorder %s40, 0
      %p119 = por %p117, %p118
      %s120 = ssub.s32 %s34, %s41
      %p121 = scmp.eq.s32.totalorder %s120, 0
      %s123 = sadd.s32 %s122, 1
      %s124 = scalar_select %p121, %s122, %s123
      %p127 = pneg %p121
      %p128 = scmp.eq.s32.totalorder %s34, 1
      %p129 = por %p127, %p128
      %p130 = scmp.ne.s32.totalorder %s122, %s125
      %p131 = scmp.eq.s32.totalorder %s34, 0
      %p132 = por %p130, %p131
      %p133 = scmp.ne.s32.totalorder %s122, %s125
      %p134 = scmp.eq.s32.totalorder %s39, 1
      %p135 = por %p133, %p134
      %p136 = scmp.ne.s32.totalorder %s125, %s126
      %p137 = scmp.eq.s32.totalorder %s39, 0
      %p138 = por %p136, %p137
      %p139 = scmp.ne.s32.totalorder %s125, %s126
      %p140 = scmp.eq.s32.totalorder %s40, 1
      %p141 = por %p139, %p140
      %p143 = scmp.ne.s32.totalorder %s126, %s142
      %p144 = scmp.eq.s32.totalorder %s40, 0
      %p145 = por %p143, %p144
      %s147 = sadd.s32 %s146, 1
      %p150 = scmp.eq.s32.totalorder %s34, 1
      %p151 = scmp.ne.s32.totalorder %s146, %s148
      %p152 = scmp.eq.s32.totalorder %s34, 0
      %p153 = por %p151, %p152
      %p154 = scmp.ne.s32.totalorder %s146, %s148
      %p155 = scmp.eq.s32.totalorder %s39, 1
      %p156 = por %p154, %p155
      %p157 = scmp.ne.s32.totalorder %s148, %s149
      %p158 = scmp.eq.s32.totalorder %s39, 0
      %p159 = por %p157, %p158
      %p160 = scmp.ne.s32.totalorder %s148, %s149
      %p161 = scmp.eq.s32.totalorder %s40, 1
      %p162 = por %p160, %p161
      %p164 = scmp.ne.s32.totalorder %s149, %s163
      %p165 = scmp.eq.s32.totalorder %s40, 0
      %p166 = por %p164, %p165
      %s168 = sadd.s32 %s167, 1
      %p171 = scmp.eq.s32.totalorder %s34, 1
      %p172 = scmp.ne.s32.totalorder %s167, %s169
      %p173 = scmp.eq.s32.totalorder %s34, 0
      %p174 = por %p172, %p173
      %p175 = scmp.ne.s32.totalorder %s167, %s169
      %p176 = scmp.eq.s32.totalorder %s39, 1
      %p177 = por %p175, %p176
      %p178 = scmp.ne.s32.totalorder %s169, %s170
      %p179 = scmp.eq.s32.totalorder %s39, 0
      %p180 = por %p178, %p179
      %p181 = scmp.ne.s32.totalorder %s169, %s170
      %p182 = scmp.eq.s32.totalorder %s40, 1
      %p183 = por %p181, %p182
      %p185 = scmp.ne.s32.totalorder %s170, %s184
      %p186 = scmp.eq.s32.totalorder %s40, 0
      %p187 = por %p185, %p186
      %s189 = sadd.s32 %s188, 1
      %p192 = scmp.eq.s32.totalorder %s34, 1
      %p193 = scmp.ne.s32.totalorder %s188, %s190
      %p194 = scmp.eq.s32.totalorder %s34, 0
      %p195 = por %p193, %p194
      %p196 = scmp.ne.s32.totalorder %s188, %s190
      %p197 = scmp.eq.s32.totalorder %s39, 1
      %p198 = por %p196, %p197
      %p199 = scmp.ne.s32.totalorder %s190, %s191
      %p200 = scmp.eq.s32.totalorder %s39, 0
      %p201 = por %p199, %p200
      %p202 = scmp.ne.s32.totalorder %s190, %s191
      %p203 = scmp.eq.s32.totalorder %s40, 1
      %p204 = por %p202, %p203
      %p206 = scmp.ne.s32.totalorder %s191, %s205
      %p207 = scmp.eq.s32.totalorder %s40, 0
      %p208 = por %p206, %p207
      %s210 = sadd.s32 %s209, 1
      %p213 = scmp.eq.s32.totalorder %s34, 1
      %p214 = scmp.ne.s32.totalorder %s209, %s211
      %p215 = scmp.eq.s32.totalorder %s34, 0
      %p216 = por %p214, %p215
      %p217 = scmp.ne.s32.totalorder %s209, %s211
      %p218 = scmp.eq.s32.totalorder %s39, 1
      %p219 = por %p217, %p218
      %p220 = scmp.ne.s32.totalorder %s211, %s212
      %p221 = scmp.eq.s32.totalorder %s39, 0
      %p222 = por %p220, %p221
      %p223 = scmp.ne.s32.totalorder %s211, %s212
      %p224 = scmp.eq.s32.totalorder %s40, 1
      %p225 = por %p223, %p224
      %p227 = scmp.ne.s32.totalorder %s212, %s226
      %p228 = scmp.eq.s32.totalorder %s40, 0
      %p229 = por %p227, %p228
      %s231 = sadd.s32 %s230, 1
      %p234 = scmp.eq.s32.totalorder %s34, 1
      %p235 = scmp.ne.s32.totalorder %s230, %s232
      %p236 = scmp.eq.s32.totalorder %s34, 0
      %p237 = por %p235, %p236
      %p238 = scmp.ne.s32.totalorder %s230, %s232
      %p239 = scmp.eq.s32.totalorder %s39, 1
      %p240 = por %p238, %p239
      %p241 = scmp.ne.s32.totalorder %s232, %s233
      %p242 = scmp.eq.s32.totalorder %s39, 0
      %p243 = por %p241, %p242
      %p244 = scmp.ne.s32.totalorder %s232, %s233
      %p245 = scmp.eq.s32.totalorder %s40, 1
      %p246 = por %p244, %p245
      %p248 = scmp.ne.s32.totalorder %s233, %s247
      %p249 = scmp.eq.s32.totalorder %s40, 0
      %p250 = por %p248, %p249
      %s252 = sadd.s32 %s251, 1
      %p255 = scmp.eq.s32.totalorder %s34, 1
      %p256 = scmp.ne.s32.totalorder %s251, %s253
      %p257 = scmp.eq.s32.totalorder %s34, 0
      %p258 = por %p256, %p257
      %p259 = scmp.ne.s32.totalorder %s251, %s253
      %p260 = scmp.eq.s32.totalorder %s39, 1
      %p261 = por %p259, %p260
      %p262 = scmp.ne.s32.totalorder %s253, %s254
      %p263 = scmp.eq.s32.totalorder %s39, 0
      %p264 = por %p262, %p263
      %p265 = scmp.ne.s32.totalorder %s253, %s254
      %p266 = scmp.eq.s32.totalorder %s40, 1
      %p267 = por %p265, %p266
      %p269 = scmp.ne.s32.totalorder %s254, %s268
      %p270 = scmp.eq.s32.totalorder %s40, 0
      %p271 = por %p269, %p270
      %s272 = ssub.s32 %s34, %s41
      %p273 = scmp.eq.s32.totalorder %s272, 0
      %s275 = sadd.s32 %s274, 1
      %s276 = scalar_select %p273, %s274, %s275
      %p279 = pneg %p273
      %p280 = scmp.eq.s32.totalorder %s34, 1
      %p281 = por %p279, %p280
      %p282 = scmp.ne.s32.totalorder %s274, %s277
      %p283 = scmp.eq.s32.totalorder %s34, 0
      %p284 = por %p282, %p283
      %p285 = scmp.ne.s32.totalorder %s274, %s277
      %p286 = scmp.eq.s32.totalorder %s39, 1
      %p287 = por %p285, %p286
      %p288 = scmp.ne.s32.totalorder %s277, %s278
      %p289 = scmp.eq.s32.totalorder %s39, 0
      %p290 = por %p288, %p289
      %p291 = scmp.ne.s32.totalorder %s277, %s278
      %p292 = scmp.eq.s32.totalorder %s40, 1
      %p293 = por %p291, %p292
      %p295 = scmp.ne.s32.totalorder %s278, %s294
      %p296 = scmp.eq.s32.totalorder %s40, 0
      %p297 = por %p295, %p296
      %s298 = ssub.s32 %s34, %s41
      %p299 = scmp.eq.s32.totalorder %s298, 0
      %s301 = sadd.s32 %s300, 1
      %s302 = scalar_select %p299, %s300, %s301
      %p305 = pneg %p299
      %p306 = scmp.eq.s32.totalorder %s34, 1
      %p307 = por %p305, %p306
      %p308 = scmp.ne.s32.totalorder %s300, %s303
      %p309 = scmp.eq.s32.totalorder %s34, 0
      %p310 = por %p308, %p309
      %p311 = scmp.ne.s32.totalorder %s300, %s303
      %p312 = scmp.eq.s32.totalorder %s39, 1
      %p313 = por %p311, %p312
      %p314 = scmp.ne.s32.totalorder %s303, %s304
      %p315 = scmp.eq.s32.totalorder %s39, 0
      %p316 = por %p314, %p315
      %p317 = scmp.ne.s32.totalorder %s303, %s304
      %p318 = scmp.eq.s32.totalorder %s40, 1
      %p319 = por %p317, %p318
      %p321 = scmp.ne.s32.totalorder %s304, %s320
      %p322 = scmp.eq.s32.totalorder %s40, 0
      %p323 = por %p321, %p322
      %p324 = scmp.le.s32.totalorder 1, %s34
      %p325 = scmp.lt.s32.totalorder %s34, 3
      %p326 = pnand %p324, %p325
      %p327 = pneg %p326
      // Predicated region
      $region9: #{tpu_custom_call.1} parent=5 // pred_check
        _
      $region10: #{tpu_custom_call.1} parent=5 // pred_check_branch
        %329 = sbr.rel (%p326) target = $region12
      $region11: #{tpu_custom_call.1} parent=5 // pred_region
        %s330 = ssub.s32 %s34, 1
        // Predicated region
        $region13: #{tpu_custom_call.1} parent=11 // pred_check
          %p331 = pneg %p159
        $region14: #{tpu_custom_call.1} parent=11 // pred_check_branch
          %333 = sbr.rel (%p331) target = $region16
        $region15: #{tpu_custom_call.1} parent=11 // pred_region
          %335 = vsyncadd [#allocation9], 0
          %s336 = sshll.u32 %s4, 4
          %s337 = int_to_ptr.hbm [resolvable:$true] %s336
          %s338 = sshll.u32 [#allocation10], 4
          %s339 = int_to_ptr.vmem [resolvable:$true] %s338
          %344 = dma.hbm_to_vmem [thread:$0]  %s337, 1024, %s339, [#allocation9], 64, 64, 4
        $region16: #{tpu_custom_call.1} parent=11 // pred_fallthru
          _
        // Predicated region
        $region17: #{tpu_custom_call.1} parent=11 // pred_check
          %p345 = pneg %p180
        $region18: #{tpu_custom_call.1} parent=11 // pred_check_branch
          %347 = sbr.rel (%p345) target = $region20
        $region19: #{tpu_custom_call.1} parent=11 // pred_region
          _
        $region20: #{tpu_custom_call.1} parent=11 // pred_fallthru
          _
        // Predicated region
        $region21: #{tpu_custom_call.1} parent=11 // pred_check
          %p348 = pneg %p201
        $region22: #{tpu_custom_call.1} parent=11 // pred_check_branch
          %350 = sbr.rel (%p348) target = $region24
        $region23: #{tpu_custom_call.1} parent=11 // pred_region
          %352 = vsyncadd [#allocation12], 0
          %s353 = sshll.u32 %s6, 4
          %s354 = int_to_ptr.hbm [resolvable:$true] %s353
          %s355 = sshll.u32 [#allocation11], 4
          %s356 = int_to_ptr.vmem [resolvable:$true] %s355
          %361 = dma.hbm_to_vmem [thread:$0]  %s354, 1024, %s356, [#allocation12], 64, 64, 4
        $region24: #{tpu_custom_call.1} parent=11 // pred_fallthru
          _
        // Predicated region
        $region25: #{tpu_custom_call.1} parent=11 // pred_check
          %p362 = pneg %p222
        $region26: #{tpu_custom_call.1} parent=11 // pred_check_branch
          %364 = sbr.rel (%p362) target = $region28
        $region27: #{tpu_custom_call.1} parent=11 // pred_region
          _
        $region28: #{tpu_custom_call.1} parent=11 // pred_fallthru
          _
        // Predicated region
        $region29: #{tpu_custom_call.1} parent=11 // pred_check
          %p365 = pneg %p243
        $region30: #{tpu_custom_call.1} parent=11 // pred_check_branch
          %367 = sbr.rel (%p365) target = $region32
        $region31: #{tpu_custom_call.1} parent=11 // pred_region
          %369 = vsyncadd [#allocation12], 0
          %s370 = sshll.u32 %s8, 4
          %s371 = int_to_ptr.hbm [resolvable:$true] %s370
          %s372 = sshll.u32 [#allocation13], 4
          %s373 = int_to_ptr.vmem [resolvable:$true] %s372
          %378 = dma.hbm_to_vmem [thread:$0]  %s371, 1024, %s373, [#allocation12], 64, 64, 4
        $region32: #{tpu_custom_call.1} parent=11 // pred_fallthru
          _
        // Predicated region
        $region33: #{tpu_custom_call.1} parent=11 // pred_check
          %p379 = pneg %p264
        $region34: #{tpu_custom_call.1} parent=11 // pred_check_branch
          %381 = sbr.rel (%p379) target = $region36
        $region35: #{tpu_custom_call.1} parent=11 // pred_region
          _
        $region36: #{tpu_custom_call.1} parent=11 // pred_fallthru
          _
      $region12: #{tpu_custom_call.1} parent=5 // pred_fallthru
        _
      %p382 = scmp.lt.s32.totalorder %s34, 2
      // Predicated region
      $region37: #{tpu_custom_call.1} parent=5 // pred_check
        %p383 = pneg %p382
      $region38: #{tpu_custom_call.1} parent=5 // pred_check_branch
        %385 = sbr.rel (%p383) target = $region40
      $region39: #{tpu_custom_call.1} parent=5 // pred_region
        // Predicated region
        $region41: #{tpu_custom_call.1} parent=39 // pred_check
          %p386 = pneg %p54
        $region42: #{tpu_custom_call.1} parent=39 // pred_check_branch
          %388 = sbr.rel (%p386) target = $region44
        $region43: #{tpu_custom_call.1} parent=39 // pred_region
          %s389 = sand.u32 %s44, 1
          %s390 = scalar_lea.sflag [#allocation3], %s389
          %s391 = sand.u32 %s44, 1
          %s392 = smul.addr %s391, 128
          %s393 = scalar_lea.vmem [#allocation2], %s392
          %s394 = smul.u32 2, %s34
          %396 = vsyncadd %s390, 0
          %s397 = smul.addr %s394, 16
          %s398 = smul.addr %s397, 4
          %s399 = scalar_lea.hbm %s0, %s398
          %s400 = sshll.u32 %s399, 4
          %s401 = int_to_ptr.hbm [resolvable:$true] %s400
          %s402 = sshll.u32 %s393, 4
          %s403 = int_to_ptr.vmem [resolvable:$true] %s402
          %408 = dma.hbm_to_vmem [thread:$0]  %s401, 2048, %s403, %s390, 64, 64, 4
        $region44: #{tpu_custom_call.1} parent=39 // pred_fallthru
          _
        // Predicated region
        $region45: #{tpu_custom_call.1} parent=39 // pred_check
          %p409 = pneg %p80
        $region46: #{tpu_custom_call.1} parent=39 // pred_check_branch
          %411 = sbr.rel (%p409) target = $region48
        $region47: #{tpu_custom_call.1} parent=39 // pred_region
          %s412 = sand.u32 %s34, 1
          %s413 = scalar_lea.sflag [#allocation6], %s412
          %s414 = sand.u32 %s70, 1
          %s415 = smul.addr %s414, 128
          %s416 = scalar_lea.vmem [#allocation5], %s415
          %s417 = smul.u32 2, %s34
          %419 = vsyncadd %s413, 0
          %s420 = smul.addr %s417, 16
          %s421 = smul.addr %s420, 4
          %s422 = scalar_lea.hbm %s1, %s421
          %s423 = sshll.u32 %s422, 4
          %s424 = int_to_ptr.hbm [resolvable:$true] %s423
          %s425 = sshll.u32 %s416, 4
          %s426 = int_to_ptr.vmem [resolvable:$true] %s425
          %431 = dma.hbm_to_vmem [thread:$0]  %s424, 2048, %s426, %s413, 64, 64, 4
        $region48: #{tpu_custom_call.1} parent=39 // pred_fallthru
          _
        // Predicated region
        $region49: #{tpu_custom_call.1} parent=39 // pred_check
          %p432 = pneg %p106
        $region50: #{tpu_custom_call.1} parent=39 // pred_check_branch
          %434 = sbr.rel (%p432) target = $region52
        $region51: #{tpu_custom_call.1} parent=39 // pred_region
          %s435 = sand.u32 %s34, 1
          %s436 = scalar_lea.sflag [#allocation6], %s435
          %s437 = sand.u32 %s96, 1
          %s438 = smul.addr %s437, 128
          %s439 = scalar_lea.vmem [#allocation7], %s438
          %s440 = smul.u32 2, %s34
          %442 = vsyncadd %s436, 0
          %s443 = smul.addr %s440, 16
          %s444 = smul.addr %s443, 4
          %s445 = scalar_lea.hbm %s2, %s444
          %s446 = sshll.u32 %s445, 4
          %s447 = int_to_ptr.hbm [resolvable:$true] %s446
          %s448 = sshll.u32 %s439, 4
          %s449 = int_to_ptr.vmem [resolvable:$true] %s448
          %454 = dma.hbm_to_vmem [thread:$0]  %s447, 2048, %s449, %s436, 64, 64, 4
        $region52: #{tpu_custom_call.1} parent=39 // pred_fallthru
          _
        // Predicated region
        $region53: #{tpu_custom_call.1} parent=39 // pred_check
          %p455 = pneg %p132
        $region54: #{tpu_custom_call.1} parent=39 // pred_check_branch
          %457 = sbr.rel (%p455) target = $region56
        $region55: #{tpu_custom_call.1} parent=39 // pred_region
          %s458 = sand.u32 %s34, 1
          %s459 = scalar_lea.sflag [#allocation9], %s458
          %s460 = sand.u32 %s122, 1
          %s461 = smul.addr %s460, 128
          %s462 = scalar_lea.vmem [#allocation8], %s461
          %s463 = smul.u32 2, %s34
          %465 = vsyncadd %s459, 0
          %s466 = smul.addr %s463, 16
          %s467 = smul.addr %s466, 4
          %s468 = scalar_lea.hbm %s3, %s467
          %s469 = sshll.u32 %s468, 4
          %s470 = int_to_ptr.hbm [resolvable:$true] %s469
          %s471 = sshll.u32 %s462, 4
          %s472 = int_to_ptr.vmem [resolvable:$true] %s471
          %477 = dma.hbm_to_vmem [thread:$0]  %s470, 2048, %s472, %s459, 64, 64, 4
        $region56: #{tpu_custom_call.1} parent=39 // pred_fallthru
          _
      $region40: #{tpu_custom_call.1} parent=5 // pred_fallthru
        _
      %p478 = scmp.le.s32.totalorder 1, %s34
      %p479 = scmp.lt.s32.totalorder %s34, 3
      %p480 = pnand %p478, %p479
      %p481 = pneg %p480
      // Predicated region
      $region57: #{tpu_custom_call.1} parent=5 // pred_check
        _
      $region58: #{tpu_custom_call.1} parent=5 // pred_check_branch
        %483 = sbr.rel (%p480) target = $region60
      $region59: #{tpu_custom_call.1} parent=5 // pred_region
        %s484 = ssub.s32 %s34, 1
        %s485 = sand.u32 %s47, 1
        %s486 = scalar_lea.sflag [#allocation3], %s485
        %s487 = sand.u32 %s47, 1
        %s488 = smul.addr %s487, 128
        %s489 = scalar_lea.vmem [#allocation2], %s488
        // Predicated region
        $region61: #{tpu_custom_call.1} parent=59 // pred_check
          %p490 = pneg %p60
        $region62: #{tpu_custom_call.1} parent=59 // pred_check_branch
          %492 = sbr.rel (%p490) target = $region64
        $region63: #{tpu_custom_call.1} parent=59 // pred_region
          %494 = dma.done %s486, 2048
        $region64: #{tpu_custom_call.1} parent=59 // pred_fallthru
          _
        %s495 = sand.u32 %s39, 1
        %s496 = scalar_lea.sflag [#allocation6], %s495
        %s497 = sand.u32 %s73, 1
        %s498 = smul.addr %s497, 128
        %s499 = scalar_lea.vmem [#allocation5], %s498
        // Predicated region
        $region65: #{tpu_custom_call.1} parent=59 // pred_check
          %p500 = pneg %p86
        $region66: #{tpu_custom_call.1} parent=59 // pred_check_branch
          %502 = sbr.rel (%p500) target = $region68
        $region67: #{tpu_custom_call.1} parent=59 // pred_region
          %504 = dma.done %s496, 2048
        $region68: #{tpu_custom_call.1} parent=59 // pred_fallthru
          _
        %s505 = sand.u32 %s39, 1
        %s506 = scalar_lea.sflag [#allocation6], %s505
        %s507 = sand.u32 %s99, 1
        %s508 = smul.addr %s507, 128
        %s509 = scalar_lea.vmem [#allocation7], %s508
        // Predicated region
        $region69: #{tpu_custom_call.1} parent=59 // pred_check
          %p510 = pneg %p112
        $region70: #{tpu_custom_call.1} parent=59 // pred_check_branch
          %512 = sbr.rel (%p510) target = $region72
        $region71: #{tpu_custom_call.1} parent=59 // pred_region
          %514 = dma.done %s506, 2048
        $region72: #{tpu_custom_call.1} parent=59 // pred_fallthru
          _
        %s515 = sand.u32 %s39, 1
        %s516 = scalar_lea.sflag [#allocation9], %s515
        %s517 = sand.u32 %s125, 1
        %s518 = smul.addr %s517, 128
        %s519 = scalar_lea.vmem [#allocation8], %s518
        // Predicated region
        $region73: #{tpu_custom_call.1} parent=59 // pred_check
          %p520 = pneg %p138
        $region74: #{tpu_custom_call.1} parent=59 // pred_check_branch
          %522 = sbr.rel (%p520) target = $region76
        $region75: #{tpu_custom_call.1} parent=59 // pred_region
          %524 = dma.done %s516, 2048
        $region76: #{tpu_custom_call.1} parent=59 // pred_fallthru
          _
        // Predicated region
        $region77: #{tpu_custom_call.1} parent=59 // pred_check
          %p525 = pneg %p159
        $region78: #{tpu_custom_call.1} parent=59 // pred_check_branch
          %527 = sbr.rel (%p525) target = $region80
        $region79: #{tpu_custom_call.1} parent=59 // pred_region
          %529 = dma.done [#allocation9], 1024
        $region80: #{tpu_custom_call.1} parent=59 // pred_fallthru
          _
        // Predicated region
        $region81: #{tpu_custom_call.1} parent=59 // pred_check
          %p530 = pneg %p201
        $region82: #{tpu_custom_call.1} parent=59 // pred_check_branch
          %532 = sbr.rel (%p530) target = $region84
        $region83: #{tpu_custom_call.1} parent=59 // pred_region
          %534 = dma.done [#allocation12], 1024
        $region84: #{tpu_custom_call.1} parent=59 // pred_fallthru
          _
        // Predicated region
        $region85: #{tpu_custom_call.1} parent=59 // pred_check
          %p535 = pneg %p243
        $region86: #{tpu_custom_call.1} parent=59 // pred_check_branch
          %537 = sbr.rel (%p535) target = $region88
        $region87: #{tpu_custom_call.1} parent=59 // pred_region
          %539 = dma.done [#allocation12], 1024
        $region88: #{tpu_custom_call.1} parent=59 // pred_fallthru
          _
        %s540 = sand.u32 %s47, 1
        %s541 = scalar_lea.sflag [#allocation3], %s540
        %s542 = sand.u32 %s47, 1
        %s543 = smul.addr %s542, 128
        %s544 = scalar_lea.vmem [#allocation2], %s543
        %p545 = pneg %p60
        %p546 = pneg %p57
        %s547 = sand.u32 %s39, 1
        %s548 = scalar_lea.sflag [#allocation6], %s547
        %s549 = sand.u32 %s73, 1
        %s550 = smul.addr %s549, 128
        %s551 = scalar_lea.vmem [#allocation5], %s550
        %p552 = pneg %p86
        %p553 = pneg %p83
        %s554 = sand.u32 %s39, 1
        %s555 = scalar_lea.sflag [#allocation6], %s554
        %s556 = sand.u32 %s99, 1
        %s557 = smul.addr %s556, 128
        %s558 = scalar_lea.vmem [#allocation7], %s557
        %p559 = pneg %p112
        %p560 = pneg %p109
        %s561 = sand.u32 %s39, 1
        %s562 = scalar_lea.sflag [#allocation9], %s561
        %s563 = sand.u32 %s125, 1
        %s564 = smul.addr %s563, 128
        %s565 = scalar_lea.vmem [#allocation8], %s564
        %p566 = pneg %p138
        %p567 = pneg %p135
        %p568 = pneg %p159
        %p569 = pneg %p156
        %p570 = pneg %p180
        %p571 = pneg %p177
        %p572 = pneg %p201
        %p573 = pneg %p198
        %p574 = pneg %p222
        %p575 = pneg %p219
        %p576 = pneg %p243
        %p577 = pneg %p240
        %p578 = pneg %p264
        %p579 = pneg %p261
        %p580 = pneg %p290
        %p581 = pneg %p287
        %s582 = sand.u32 %s277, 1
        %s583 = scalar_lea.sflag [#allocation4], %s582
        %s584 = sand.u32 %s277, 1
        %s585 = smul.addr %s584, 256
        %s586 = scalar_lea.vmem [#allocation14], %s585
        %p587 = pneg %p316
        %p588 = pneg %p313
        %s589 = sand.u32 %s303, 1
        %s590 = scalar_lea.sflag [#allocation16], %s589
        %s591 = sand.u32 %s303, 1
        %s592 = smul.addr %s591, 256
        %s593 = scalar_lea.vmem [#allocation15], %s592
        %s594 = smul.u32 2, %s39
        %s595 = smul.u32 2, %s39
        %s596 = smul.u32 2, %s39
        %s597 = smul.u32 2, %s39
        %s598 = smul.u32 2, %s39
        %s599 = smul.u32 2, %s39
        %v600 = vld [vmem:[%s489] sm:$0xf]
        %v601 = vld [vmem:[%s489 + $0x4] sm:$0xf]
        %v602 = vld [vmem:[%s489 + $0x8] sm:$0xf]
        %v603 = vld [vmem:[%s489 + $0xc] sm:$0xf]
        %v604 = vld [vmem:[%s489 + $0x10] sm:$0xf]
        %v605 = vld [vmem:[%s489 + $0x14] sm:$0xf]
        %v606 = vld [vmem:[%s489 + $0x18] sm:$0xf]
        %v607 = vld [vmem:[%s489 + $0x1c] sm:$0xf]
        %v608 = vld [vmem:[%s489 + $0x20] sm:$0xf]
        %v609 = vld [vmem:[%s489 + $0x24] sm:$0xf]
        %v610 = vld [vmem:[%s489 + $0x28] sm:$0xf]
        %v611 = vld [vmem:[%s489 + $0x2c] sm:$0xf]
        %v612 = vld [vmem:[%s489 + $0x30] sm:$0xf]
        %v613 = vld [vmem:[%s489 + $0x34] sm:$0xf]
        %v614 = vld [vmem:[%s489 + $0x38] sm:$0xf]
        %v615 = vld [vmem:[%s489 + $0x3c] sm:$0xf]
        %v616 = vld [vmem:[%s489 + $0x40] sm:$0xf]
        %v617 = vld [vmem:[%s489 + $0x44] sm:$0xf]
        %v618 = vld [vmem:[%s489 + $0x48] sm:$0xf]
        %v619 = vld [vmem:[%s489 + $0x4c] sm:$0xf]
        %v620 = vld [vmem:[%s489 + $0x50] sm:$0xf]
        %v621 = vld [vmem:[%s489 + $0x54] sm:$0xf]
        %v622 = vld [vmem:[%s489 + $0x58] sm:$0xf]
        %v623 = vld [vmem:[%s489 + $0x5c] sm:$0xf]
        %v624 = vld [vmem:[%s489 + $0x60] sm:$0xf]
        %v625 = vld [vmem:[%s489 + $0x64] sm:$0xf]
        %v626 = vld [vmem:[%s489 + $0x68] sm:$0xf]
        %v627 = vld [vmem:[%s489 + $0x6c] sm:$0xf]
        %v628 = vld [vmem:[%s489 + $0x70] sm:$0xf]
        %v629 = vld [vmem:[%s489 + $0x74] sm:$0xf]
        %v630 = vld [vmem:[%s489 + $0x78] sm:$0xf]
        %v631 = vld [vmem:[%s489 + $0x7c] sm:$0xf]
        %v632 = vld [vmem:[%s499] sm:$0xf]
        %v633 = vld [vmem:[%s499 + $0x4] sm:$0xf]
        %v634 = vld [vmem:[%s499 + $0x8] sm:$0xf]
        %v635 = vld [vmem:[%s499 + $0xc] sm:$0xf]
        %v636 = vld [vmem:[%s499 + $0x10] sm:$0xf]
        %v637 = vld [vmem:[%s499 + $0x14] sm:$0xf]
        %v638 = vld [vmem:[%s499 + $0x18] sm:$0xf]
        %v639 = vld [vmem:[%s499 + $0x1c] sm:$0xf]
        %v640 = vld [vmem:[%s499 + $0x20] sm:$0xf]
        %v641 = vld [vmem:[%s499 + $0x24] sm:$0xf]
        %v642 = vld [vmem:[%s499 + $0x28] sm:$0xf]
        %v643 = vld [vmem:[%s499 + $0x2c] sm:$0xf]
        %v644 = vld [vmem:[%s499 + $0x30] sm:$0xf]
        %v645 = vld [vmem:[%s499 + $0x34] sm:$0xf]
        %v646 = vld [vmem:[%s499 + $0x38] sm:$0xf]
        %v647 = vld [vmem:[%s499 + $0x3c] sm:$0xf]
        %v648 = vld [vmem:[%s499 + $0x40] sm:$0xf]
        %v649 = vld [vmem:[%s499 + $0x44] sm:$0xf]
        %v650 = vld [vmem:[%s499 + $0x48] sm:$0xf]
        %v651 = vld [vmem:[%s499 + $0x4c] sm:$0xf]
        %v652 = vld [vmem:[%s499 + $0x50] sm:$0xf]
        %v653 = vld [vmem:[%s499 + $0x54] sm:$0xf]
        %v654 = vld [vmem:[%s499 + $0x58] sm:$0xf]
        %v655 = vld [vmem:[%s499 + $0x5c] sm:$0xf]
        %v656 = vld [vmem:[%s499 + $0x60] sm:$0xf]
        %v657 = vld [vmem:[%s499 + $0x64] sm:$0xf]
        %v658 = vld [vmem:[%s499 + $0x68] sm:$0xf]
        %v659 = vld [vmem:[%s499 + $0x6c] sm:$0xf]
        %v660 = vld [vmem:[%s499 + $0x70] sm:$0xf]
        %v661 = vld [vmem:[%s499 + $0x74] sm:$0xf]
        %v662 = vld [vmem:[%s499 + $0x78] sm:$0xf]
        %v663 = vld [vmem:[%s499 + $0x7c] sm:$0xf]
        %v664 = vld [vmem:[%s509] sm:$0xf]
        %v665 = vld [vmem:[%s509 + $0x4] sm:$0xf]
        %v666 = vld [vmem:[%s509 + $0x8] sm:$0xf]
        %v667 = vld [vmem:[%s509 + $0xc] sm:$0xf]
        %v668 = vld [vmem:[%s509 + $0x10] sm:$0xf]
        %v669 = vld [vmem:[%s509 + $0x14] sm:$0xf]
        %v670 = vld [vmem:[%s509 + $0x18] sm:$0xf]
        %v671 = vld [vmem:[%s509 + $0x1c] sm:$0xf]
        %v672 = vld [vmem:[%s509 + $0x20] sm:$0xf]
        %v673 = vld [vmem:[%s509 + $0x24] sm:$0xf]
        %v674 = vld [vmem:[%s509 + $0x28] sm:$0xf]
        %v675 = vld [vmem:[%s509 + $0x2c] sm:$0xf]
        %v676 = vld [vmem:[%s509 + $0x30] sm:$0xf]
        %v677 = vld [vmem:[%s509 + $0x34] sm:$0xf]
        %v678 = vld [vmem:[%s509 + $0x38] sm:$0xf]
        %v679 = vld [vmem:[%s509 + $0x3c] sm:$0xf]
        %v680 = vld [vmem:[%s509 + $0x40] sm:$0xf]
        %v681 = vld [vmem:[%s509 + $0x44] sm:$0xf]
        %v682 = vld [vmem:[%s509 + $0x48] sm:$0xf]
        %v683 = vld [vmem:[%s509 + $0x4c] sm:$0xf]
        %v684 = vld [vmem:[%s509 + $0x50] sm:$0xf]
        %v685 = vld [vmem:[%s509 + $0x54] sm:$0xf]
        %v686 = vld [vmem:[%s509 + $0x58] sm:$0xf]
        %v687 = vld [vmem:[%s509 + $0x5c] sm:$0xf]
        %v688 = vld [vmem:[%s509 + $0x60] sm:$0xf]
        %v689 = vld [vmem:[%s509 + $0x64] sm:$0xf]
        %v690 = vld [vmem:[%s509 + $0x68] sm:$0xf]
        %v691 = vld [vmem:[%s509 + $0x6c] sm:$0xf]
        %v692 = vld [vmem:[%s509 + $0x70] sm:$0xf]
        %v693 = vld [vmem:[%s509 + $0x74] sm:$0xf]
        %v694 = vld [vmem:[%s509 + $0x78] sm:$0xf]
        %v695 = vld [vmem:[%s509 + $0x7c] sm:$0xf]
        %v696 = vld [vmem:[#allocation10] sm:$0xf]
        %v697 = vld [vmem:[#allocation10 + $0x4] sm:$0xf]
        %v698 = vld [vmem:[#allocation10 + $0x8] sm:$0xf]
        %v699 = vld [vmem:[#allocation10 + $0xc] sm:$0xf]
        %v700 = vld [vmem:[#allocation10 + $0x10] sm:$0xf]
        %v701 = vld [vmem:[#allocation10 + $0x14] sm:$0xf]
        %v702 = vld [vmem:[#allocation10 + $0x18] sm:$0xf]
        %v703 = vld [vmem:[#allocation10 + $0x1c] sm:$0xf]
        %v704 = vld [vmem:[#allocation10 + $0x20] sm:$0xf]
        %v705 = vld [vmem:[#allocation10 + $0x24] sm:$0xf]
        %v706 = vld [vmem:[#allocation10 + $0x28] sm:$0xf]
        %v707 = vld [vmem:[#allocation10 + $0x2c] sm:$0xf]
        %v708 = vld [vmem:[#allocation10 + $0x30] sm:$0xf]
        %v709 = vld [vmem:[#allocation10 + $0x34] sm:$0xf]
        %v710 = vld [vmem:[#allocation10 + $0x38] sm:$0xf]
        %v711 = vld [vmem:[#allocation10 + $0x3c] sm:$0xf]
        %v712 = vld [vmem:[%s5] sm:$0x1]
        %v714 = vperm.slane %v712, 0
        %v748 = vunpack.c.l.b16 %v600
        %v749 = vunpack.c.l.b16 %v601
        %v750 = vunpack.c.l.b16 %v602
        %v751 = vunpack.c.l.b16 %v603
        %v752 = vunpack.c.l.b16 %v604
        %v753 = vunpack.c.l.b16 %v605
        %v754 = vunpack.c.l.b16 %v606
        %v755 = vunpack.c.l.b16 %v607
        %v756 = vunpack.c.l.b16 %v608
        %v757 = vunpack.c.l.b16 %v609
        %v758 = vunpack.c.l.b16 %v610
        %v759 = vunpack.c.l.b16 %v611
        %v760 = vunpack.c.l.b16 %v612
        %v761 = vunpack.c.l.b16 %v613
        %v762 = vunpack.c.l.b16 %v614
        %v763 = vunpack.c.l.b16 %v615
        %v764 = vunpack.c.l.b16 %v616
        %v765 = vunpack.c.l.b16 %v617
        %v766 = vunpack.c.l.b16 %v618
        %v767 = vunpack.c.l.b16 %v619
        %v768 = vunpack.c.l.b16 %v620
        %v769 = vunpack.c.l.b16 %v621
        %v770 = vunpack.c.l.b16 %v622
        %v771 = vunpack.c.l.b16 %v623
        %v772 = vunpack.c.l.b16 %v624
        %v773 = vunpack.c.l.b16 %v625
        %v774 = vunpack.c.l.b16 %v626
        %v775 = vunpack.c.l.b16 %v627
        %v776 = vunpack.c.l.b16 %v628
        %v777 = vunpack.c.l.b16 %v629
        %v778 = vunpack.c.l.b16 %v630
        %v779 = vunpack.c.l.b16 %v631
        %v780 = vpack.c.b16 %v749, %v748
        %v781 = vpack.c.b16 %v751, %v750
        %v782 = vpack.c.b16 %v753, %v752
        %v783 = vpack.c.b16 %v755, %v754
        %v784 = vpack.c.b16 %v757, %v756
        %v785 = vpack.c.b16 %v759, %v758
        %v786 = vpack.c.b16 %v761, %v760
        %v787 = vpack.c.b16 %v763, %v762
        %v788 = vpack.c.b16 %v765, %v764
        %v789 = vpack.c.b16 %v767, %v766
        %v790 = vpack.c.b16 %v769, %v768
        %v791 = vpack.c.b16 %v771, %v770
        %v792 = vpack.c.b16 %v773, %v772
        %v793 = vpack.c.b16 %v775, %v774
        %v794 = vpack.c.b16 %v777, %v776
        %v795 = vpack.c.b16 %v779, %v778
        %v828 = vunpack.c.l.b16 %v696
        %v829 = vunpack.c.l.b16 %v697
        %v830 = vunpack.c.l.b16 %v698
        %v831 = vunpack.c.l.b16 %v699
        %v832 = vunpack.c.l.b16 %v700
        %v833 = vunpack.c.l.b16 %v701
        %v834 = vunpack.c.l.b16 %v702
        %v835 = vunpack.c.l.b16 %v703
        %v836 = vunpack.c.l.b16 %v704
        %v837 = vunpack.c.l.b16 %v705
        %v838 = vunpack.c.l.b16 %v706
        %v839 = vunpack.c.l.b16 %v707
        %v840 = vunpack.c.l.b16 %v708
        %v841 = vunpack.c.l.b16 %v709
        %v842 = vunpack.c.l.b16 %v710
        %v843 = vunpack.c.l.b16 %v711
        %v844 = vpack.c.b16 %v829, %v828
        %v845 = vpack.c.b16 %v831, %v830
        %v846 = vpack.c.b16 %v833, %v832
        %v847 = vpack.c.b16 %v835, %v834
        %v848 = vpack.c.b16 %v837, %v836
        %v849 = vpack.c.b16 %v839, %v838
        %v850 = vpack.c.b16 %v841, %v840
        %v851 = vpack.c.b16 %v843, %v842
        %860 = vmatpush.bf16.msra.mxu0 %v851
        %861 = vmatpush.bf16.msra.mxu0 %v850
        %862 = vmatpush.bf16.msra.mxu0 %v849
        %863 = vmatpush.bf16.msra.mxu0 %v848
        %864 = vmatpush.bf16.msra.mxu0 %v847
        %865 = vmatpush.bf16.msra.mxu0 %v846
        %866 = vmatpush.bf16.msra.mxu0 %v845
        %867 = vmatpush.bf16.msra.mxu0 %v844
        %868 = vmatmul.bf16.gmra.mxu0 %v780
        %v869 = vpop.f32.mrf.mxu0
        %v870 = vadd.f32 %v714, %v869
        %v871 = vpop.f32.mrf.mxu0
        %v872 = vadd.f32 %v714, %v871
        %873 = vmatmul.bf16.gmra.mxu0 %v781
        %v874 = vpop.f32.mrf.mxu0
        %v875 = vadd.f32 %v714, %v874
        %v876 = vpop.f32.mrf.mxu0
        %v877 = vadd.f32 %v714, %v876
        %878 = vmatmul.bf16.gmra.mxu0 %v782
        %v879 = vpop.f32.mrf.mxu0
        %v880 = vadd.f32 %v714, %v879
        %v881 = vpop.f32.mrf.mxu0
        %v882 = vadd.f32 %v714, %v881
        %883 = vmatmul.bf16.gmra.mxu0 %v783
        %v884 = vpop.f32.mrf.mxu0
        %v885 = vadd.f32 %v714, %v884
        %v886 = vpop.f32.mrf.mxu0
        %v887 = vadd.f32 %v714, %v886
        %888 = vmatmul.bf16.gmra.mxu0 %v784
        %v889 = vpop.f32.mrf.mxu0
        %v890 = vadd.f32 %v714, %v889
        %v891 = vpop.f32.mrf.mxu0
        %v892 = vadd.f32 %v714, %v891
        %893 = vmatmul.bf16.gmra.mxu0 %v785
        %v894 = vpop.f32.mrf.mxu0
        %v895 = vadd.f32 %v714, %v894
        %v896 = vpop.f32.mrf.mxu0
        %v897 = vadd.f32 %v714, %v896
        %898 = vmatmul.bf16.gmra.mxu0 %v786
        %v899 = vpop.f32.mrf.mxu0
        %v900 = vadd.f32 %v714, %v899
        %v901 = vpop.f32.mrf.mxu0
        %v902 = vadd.f32 %v714, %v901
        %903 = vmatmul.bf16.gmra.mxu0 %v787
        %v904 = vpop.f32.mrf.mxu0
        %v905 = vadd.f32 %v714, %v904
        %v906 = vpop.f32.mrf.mxu0
        %v907 = vadd.f32 %v714, %v906
        %908 = vmatmul.bf16.gmra.mxu0 %v788
        %v909 = vpop.f32.mrf.mxu0
        %v910 = vadd.f32 %v714, %v909
        %v911 = vpop.f32.mrf.mxu0
        %v912 = vadd.f32 %v714, %v911
        %913 = vmatmul.bf16.gmra.mxu0 %v789
        %v914 = vpop.f32.mrf.mxu0
        %v915 = vadd.f32 %v714, %v914
        %v916 = vpop.f32.mrf.mxu0
        %v917 = vadd.f32 %v714, %v916
        %918 = vmatmul.bf16.gmra.mxu0 %v790
        %v919 = vpop.f32.mrf.mxu0
        %v920 = vadd.f32 %v714, %v919
        %v921 = vpop.f32.mrf.mxu0
        %v922 = vadd.f32 %v714, %v921
        %923 = vmatmul.bf16.gmra.mxu0 %v791
        %v924 = vpop.f32.mrf.mxu0
        %v925 = vadd.f32 %v714, %v924
        %v926 = vpop.f32.mrf.mxu0
        %v927 = vadd.f32 %v714, %v926
        %928 = vmatmul.bf16.gmra.mxu0 %v792
        %v929 = vpop.f32.mrf.mxu0
        %v930 = vadd.f32 %v714, %v929
        %v931 = vpop.f32.mrf.mxu0
        %v932 = vadd.f32 %v714, %v931
        %933 = vmatmul.bf16.gmra.mxu0 %v793
        %v934 = vpop.f32.mrf.mxu0
        %v935 = vadd.f32 %v714, %v934
        %v936 = vpop.f32.mrf.mxu0
        %v937 = vadd.f32 %v714, %v936
        %938 = vmatmul.bf16.gmra.mxu0 %v794
        %v939 = vpop.f32.mrf.mxu0
        %v940 = vadd.f32 %v714, %v939
        %v941 = vpop.f32.mrf.mxu0
        %v942 = vadd.f32 %v714, %v941
        %943 = vmatmul.bf16.gmra.mxu0 %v795
        %v944 = vpop.f32.mrf.mxu0
        %v945 = vadd.f32 %v714, %v944
        %v946 = vpop.f32.mrf.mxu0
        %v947 = vadd.f32 %v714, %v946
        %948 = vdwg.mxu0
        %v949 = vld [vmem:[#allocation11] sm:$0xf]
        %v950 = vld [vmem:[#allocation11 + $0x4] sm:$0xf]
        %v951 = vld [vmem:[#allocation11 + $0x8] sm:$0xf]
        %v952 = vld [vmem:[#allocation11 + $0xc] sm:$0xf]
        %v953 = vld [vmem:[#allocation11 + $0x10] sm:$0xf]
        %v954 = vld [vmem:[#allocation11 + $0x14] sm:$0xf]
        %v955 = vld [vmem:[#allocation11 + $0x18] sm:$0xf]
        %v956 = vld [vmem:[#allocation11 + $0x1c] sm:$0xf]
        %v957 = vld [vmem:[#allocation11 + $0x20] sm:$0xf]
        %v958 = vld [vmem:[#allocation11 + $0x24] sm:$0xf]
        %v959 = vld [vmem:[#allocation11 + $0x28] sm:$0xf]
        %v960 = vld [vmem:[#allocation11 + $0x2c] sm:$0xf]
        %v961 = vld [vmem:[#allocation11 + $0x30] sm:$0xf]
        %v962 = vld [vmem:[#allocation11 + $0x34] sm:$0xf]
        %v963 = vld [vmem:[#allocation11 + $0x38] sm:$0xf]
        %v964 = vld [vmem:[#allocation11 + $0x3c] sm:$0xf]
        %v965 = vld [vmem:[%s7] sm:$0x1]
        %v967 = vperm.slane %v965, 0
        %v1001 = vunpack.c.l.b16 %v632
        %v1002 = vunpack.c.l.b16 %v633
        %v1003 = vunpack.c.l.b16 %v634
        %v1004 = vunpack.c.l.b16 %v635
        %v1005 = vunpack.c.l.b16 %v636
        %v1006 = vunpack.c.l.b16 %v637
        %v1007 = vunpack.c.l.b16 %v638
        %v1008 = vunpack.c.l.b16 %v639
        %v1009 = vunpack.c.l.b16 %v640
        %v1010 = vunpack.c.l.b16 %v641
        %v1011 = vunpack.c.l.b16 %v642
        %v1012 = vunpack.c.l.b16 %v643
        %v1013 = vunpack.c.l.b16 %v644
        %v1014 = vunpack.c.l.b16 %v645
        %v1015 = vunpack.c.l.b16 %v646
        %v1016 = vunpack.c.l.b16 %v647
        %v1017 = vunpack.c.l.b16 %v648
        %v1018 = vunpack.c.l.b16 %v649
        %v1019 = vunpack.c.l.b16 %v650
        %v1020 = vunpack.c.l.b16 %v651
        %v1021 = vunpack.c.l.b16 %v652
        %v1022 = vunpack.c.l.b16 %v653
        %v1023 = vunpack.c.l.b16 %v654
        %v1024 = vunpack.c.l.b16 %v655
        %v1025 = vunpack.c.l.b16 %v656
        %v1026 = vunpack.c.l.b16 %v657
        %v1027 = vunpack.c.l.b16 %v658
        %v1028 = vunpack.c.l.b16 %v659
        %v1029 = vunpack.c.l.b16 %v660
        %v1030 = vunpack.c.l.b16 %v661
        %v1031 = vunpack.c.l.b16 %v662
        %v1032 = vunpack.c.l.b16 %v663
        %v1033 = vpack.c.b16 %v1002, %v1001
        %v1034 = vpack.c.b16 %v1004, %v1003
        %v1035 = vpack.c.b16 %v1006, %v1005
        %v1036 = vpack.c.b16 %v1008, %v1007
        %v1037 = vpack.c.b16 %v1010, %v1009
        %v1038 = vpack.c.b16 %v1012, %v1011
        %v1039 = vpack.c.b16 %v1014, %v1013
        %v1040 = vpack.c.b16 %v1016, %v1015
        %v1041 = vpack.c.b16 %v1018, %v1017
        %v1042 = vpack.c.b16 %v1020, %v1019
        %v1043 = vpack.c.b16 %v1022, %v1021
        %v1044 = vpack.c.b16 %v1024, %v1023
        %v1045 = vpack.c.b16 %v1026, %v1025
        %v1046 = vpack.c.b16 %v1028, %v1027
        %v1047 = vpack.c.b16 %v1030, %v1029
        %v1048 = vpack.c.b16 %v1032, %v1031
        %v1081 = vunpack.c.l.b16 %v949
        %v1082 = vunpack.c.l.b16 %v950
        %v1083 = vunpack.c.l.b16 %v951
        %v1084 = vunpack.c.l.b16 %v952
        %v1085 = vunpack.c.l.b16 %v953
        %v1086 = vunpack.c.l.b16 %v954
        %v1087 = vunpack.c.l.b16 %v955
        %v1088 = vunpack.c.l.b16 %v956
        %v1089 = vunpack.c.l.b16 %v957
        %v1090 = vunpack.c.l.b16 %v958
        %v1091 = vunpack.c.l.b16 %v959
        %v1092 = vunpack.c.l.b16 %v960
        %v1093 = vunpack.c.l.b16 %v961
        %v1094 = vunpack.c.l.b16 %v962
        %v1095 = vunpack.c.l.b16 %v963
        %v1096 = vunpack.c.l.b16 %v964
        %v1097 = vpack.c.b16 %v1082, %v1081
        %v1098 = vpack.c.b16 %v1084, %v1083
        %v1099 = vpack.c.b16 %v1086, %v1085
        %v1100 = vpack.c.b16 %v1088, %v1087
        %v1101 = vpack.c.b16 %v1090, %v1089
        %v1102 = vpack.c.b16 %v1092, %v1091
        %v1103 = vpack.c.b16 %v1094, %v1093
        %v1104 = vpack.c.b16 %v1096, %v1095
        %1113 = vmatpush.bf16.msra.mxu0 %v1104
        %1114 = vmatpush.bf16.msra.mxu0 %v1103
        %1115 = vmatpush.bf16.msra.mxu0 %v1102
        %1116 = vmatpush.bf16.msra.mxu0 %v1101
        %1117 = vmatpush.bf16.msra.mxu0 %v1100
        %1118 = vmatpush.bf16.msra.mxu0 %v1099
        %1119 = vmatpush.bf16.msra.mxu0 %v1098
        %1120 = vmatpush.bf16.msra.mxu0 %v1097
        %1121 = vmatmul.bf16.gmra.mxu0 %v1033
        %v1122 = vpop.f32.mrf.mxu0
        %v1123 = vadd.f32 %v967, %v1122
        %v1124 = vpop.f32.mrf.mxu0
        %v1125 = vadd.f32 %v967, %v1124
        %1126 = vmatmul.bf16.gmra.mxu0 %v1034
        %v1127 = vpop.f32.mrf.mxu0
        %v1128 = vadd.f32 %v967, %v1127
        %v1129 = vpop.f32.mrf.mxu0
        %v1130 = vadd.f32 %v967, %v1129
        %1131 = vmatmul.bf16.gmra.mxu0 %v1035
        %v1132 = vpop.f32.mrf.mxu0
        %v1133 = vadd.f32 %v967, %v1132
        %v1134 = vpop.f32.mrf.mxu0
        %v1135 = vadd.f32 %v967, %v1134
        %1136 = vmatmul.bf16.gmra.mxu0 %v1036
        %v1137 = vpop.f32.mrf.mxu0
        %v1138 = vadd.f32 %v967, %v1137
        %v1139 = vpop.f32.mrf.mxu0
        %v1140 = vadd.f32 %v967, %v1139
        %1141 = vmatmul.bf16.gmra.mxu0 %v1037
        %v1142 = vpop.f32.mrf.mxu0
        %v1143 = vadd.f32 %v967, %v1142
        %v1144 = vpop.f32.mrf.mxu0
        %v1145 = vadd.f32 %v967, %v1144
        %1146 = vmatmul.bf16.gmra.mxu0 %v1038
        %v1147 = vpop.f32.mrf.mxu0
        %v1148 = vadd.f32 %v967, %v1147
        %v1149 = vpop.f32.mrf.mxu0
        %v1150 = vadd.f32 %v967, %v1149
        %1151 = vmatmul.bf16.gmra.mxu0 %v1039
        %v1152 = vpop.f32.mrf.mxu0
        %v1153 = vadd.f32 %v967, %v1152
        %v1154 = vpop.f32.mrf.mxu0
        %v1155 = vadd.f32 %v967, %v1154
        %1156 = vmatmul.bf16.gmra.mxu0 %v1040
        %v1157 = vpop.f32.mrf.mxu0
        %v1158 = vadd.f32 %v967, %v1157
        %v1159 = vpop.f32.mrf.mxu0
        %v1160 = vadd.f32 %v967, %v1159
        %1161 = vmatmul.bf16.gmra.mxu0 %v1041
        %v1162 = vpop.f32.mrf.mxu0
        %v1163 = vadd.f32 %v967, %v1162
        %v1164 = vpop.f32.mrf.mxu0
        %v1165 = vadd.f32 %v967, %v1164
        %1166 = vmatmul.bf16.gmra.mxu0 %v1042
        %v1167 = vpop.f32.mrf.mxu0
        %v1168 = vadd.f32 %v967, %v1167
        %v1169 = vpop.f32.mrf.mxu0
        %v1170 = vadd.f32 %v967, %v1169
        %1171 = vmatmul.bf16.gmra.mxu0 %v1043
        %v1172 = vpop.f32.mrf.mxu0
        %v1173 = vadd.f32 %v967, %v1172
        %v1174 = vpop.f32.mrf.mxu0
        %v1175 = vadd.f32 %v967, %v1174
        %1176 = vmatmul.bf16.gmra.mxu0 %v1044
        %v1177 = vpop.f32.mrf.mxu0
        %v1178 = vadd.f32 %v967, %v1177
        %v1179 = vpop.f32.mrf.mxu0
        %v1180 = vadd.f32 %v967, %v1179
        %1181 = vmatmul.bf16.gmra.mxu0 %v1045
        %v1182 = vpop.f32.mrf.mxu0
        %v1183 = vadd.f32 %v967, %v1182
        %v1184 = vpop.f32.mrf.mxu0
        %v1185 = vadd.f32 %v967, %v1184
        %1186 = vmatmul.bf16.gmra.mxu0 %v1046
        %v1187 = vpop.f32.mrf.mxu0
        %v1188 = vadd.f32 %v967, %v1187
        %v1189 = vpop.f32.mrf.mxu0
        %v1190 = vadd.f32 %v967, %v1189
        %1191 = vmatmul.bf16.gmra.mxu0 %v1047
        %v1192 = vpop.f32.mrf.mxu0
        %v1193 = vadd.f32 %v967, %v1192
        %v1194 = vpop.f32.mrf.mxu0
        %v1195 = vadd.f32 %v967, %v1194
        %1196 = vmatmul.bf16.gmra.mxu0 %v1048
        %v1197 = vpop.f32.mrf.mxu0
        %v1198 = vadd.f32 %v967, %v1197
        %v1199 = vpop.f32.mrf.mxu0
        %v1200 = vadd.f32 %v967, %v1199
        %1201 = vdwg.mxu0
        %v1202 = vld [vmem:[#allocation13] sm:$0xf]
        %v1203 = vld [vmem:[#allocation13 + $0x4] sm:$0xf]
        %v1204 = vld [vmem:[#allocation13 + $0x8] sm:$0xf]
        %v1205 = vld [vmem:[#allocation13 + $0xc] sm:$0xf]
        %v1206 = vld [vmem:[#allocation13 + $0x10] sm:$0xf]
        %v1207 = vld [vmem:[#allocation13 + $0x14] sm:$0xf]
        %v1208 = vld [vmem:[#allocation13 + $0x18] sm:$0xf]
        %v1209 = vld [vmem:[#allocation13 + $0x1c] sm:$0xf]
        %v1210 = vld [vmem:[#allocation13 + $0x20] sm:$0xf]
        %v1211 = vld [vmem:[#allocation13 + $0x24] sm:$0xf]
        %v1212 = vld [vmem:[#allocation13 + $0x28] sm:$0xf]
        %v1213 = vld [vmem:[#allocation13 + $0x2c] sm:$0xf]
        %v1214 = vld [vmem:[#allocation13 + $0x30] sm:$0xf]
        %v1215 = vld [vmem:[#allocation13 + $0x34] sm:$0xf]
        %v1216 = vld [vmem:[#allocation13 + $0x38] sm:$0xf]
        %v1217 = vld [vmem:[#allocation13 + $0x3c] sm:$0xf]
        %v1218 = vld [vmem:[%s9] sm:$0x1]
        %v1220 = vperm.slane %v1218, 0
        %v1254 = vunpack.c.l.b16 %v664
        %v1255 = vunpack.c.l.b16 %v665
        %v1256 = vunpack.c.l.b16 %v666
        %v1257 = vunpack.c.l.b16 %v667
        %v1258 = vunpack.c.l.b16 %v668
        %v1259 = vunpack.c.l.b16 %v669
        %v1260 = vunpack.c.l.b16 %v670
        %v1261 = vunpack.c.l.b16 %v671
        %v1262 = vunpack.c.l.b16 %v672
        %v1263 = vunpack.c.l.b16 %v673
        %v1264 = vunpack.c.l.b16 %v674
        %v1265 = vunpack.c.l.b16 %v675
        %v1266 = vunpack.c.l.b16 %v676
        %v1267 = vunpack.c.l.b16 %v677
        %v1268 = vunpack.c.l.b16 %v678
        %v1269 = vunpack.c.l.b16 %v679
        %v1270 = vunpack.c.l.b16 %v680
        %v1271 = vunpack.c.l.b16 %v681
        %v1272 = vunpack.c.l.b16 %v682
        %v1273 = vunpack.c.l.b16 %v683
        %v1274 = vunpack.c.l.b16 %v684
        %v1275 = vunpack.c.l.b16 %v685
        %v1276 = vunpack.c.l.b16 %v686
        %v1277 = vunpack.c.l.b16 %v687
        %v1278 = vunpack.c.l.b16 %v688
        %v1279 = vunpack.c.l.b16 %v689
        %v1280 = vunpack.c.l.b16 %v690
        %v1281 = vunpack.c.l.b16 %v691
        %v1282 = vunpack.c.l.b16 %v692
        %v1283 = vunpack.c.l.b16 %v693
        %v1284 = vunpack.c.l.b16 %v694
        %v1285 = vunpack.c.l.b16 %v695
        %v1286 = vpack.c.b16 %v1255, %v1254
        %v1287 = vpack.c.b16 %v1257, %v1256
        %v1288 = vpack.c.b16 %v1259, %v1258
        %v1289 = vpack.c.b16 %v1261, %v1260
        %v1290 = vpack.c.b16 %v1263, %v1262
        %v1291 = vpack.c.b16 %v1265, %v1264
        %v1292 = vpack.c.b16 %v1267, %v1266
        %v1293 = vpack.c.b16 %v1269, %v1268
        %v1294 = vpack.c.b16 %v1271, %v1270
        %v1295 = vpack.c.b16 %v1273, %v1272
        %v1296 = vpack.c.b16 %v1275, %v1274
        %v1297 = vpack.c.b16 %v1277, %v1276
        %v1298 = vpack.c.b16 %v1279, %v1278
        %v1299 = vpack.c.b16 %v1281, %v1280
        %v1300 = vpack.c.b16 %v1283, %v1282
        %v1301 = vpack.c.b16 %v1285, %v1284
        %v1334 = vunpack.c.l.b16 %v1202
        %v1335 = vunpack.c.l.b16 %v1203
        %v1336 = vunpack.c.l.b16 %v1204
        %v1337 = vunpack.c.l.b16 %v1205
        %v1338 = vunpack.c.l.b16 %v1206
        %v1339 = vunpack.c.l.b16 %v1207
        %v1340 = vunpack.c.l.b16 %v1208
        %v1341 = vunpack.c.l.b16 %v1209
        %v1342 = vunpack.c.l.b16 %v1210
        %v1343 = vunpack.c.l.b16 %v1211
        %v1344 = vunpack.c.l.b16 %v1212
        %v1345 = vunpack.c.l.b16 %v1213
        %v1346 = vunpack.c.l.b16 %v1214
        %v1347 = vunpack.c.l.b16 %v1215
        %v1348 = vunpack.c.l.b16 %v1216
        %v1349 = vunpack.c.l.b16 %v1217
        %v1350 = vpack.c.b16 %v1335, %v1334
        %v1351 = vpack.c.b16 %v1337, %v1336
        %v1352 = vpack.c.b16 %v1339, %v1338
        %v1353 = vpack.c.b16 %v1341, %v1340
        %v1354 = vpack.c.b16 %v1343, %v1342
        %v1355 = vpack.c.b16 %v1345, %v1344
        %v1356 = vpack.c.b16 %v1347, %v1346
        %v1357 = vpack.c.b16 %v1349, %v1348
        %1366 = vmatpush.bf16.msra.mxu0 %v1357
        %1367 = vmatpush.bf16.msra.mxu0 %v1356
        %1368 = vmatpush.bf16.msra.mxu0 %v1355
        %1369 = vmatpush.bf16.msra.mxu0 %v1354
        %1370 = vmatpush.bf16.msra.mxu0 %v1353
        %1371 = vmatpush.bf16.msra.mxu0 %v1352
        %1372 = vmatpush.bf16.msra.mxu0 %v1351
        %1373 = vmatpush.bf16.msra.mxu0 %v1350
        %1374 = vmatmul.bf16.gmra.mxu0 %v1286
        %v1375 = vpop.f32.mrf.mxu0
        %v1376 = vadd.f32 %v1220, %v1375
        %v1377 = vpop.f32.mrf.mxu0
        %v1378 = vadd.f32 %v1220, %v1377
        %1379 = vmatmul.bf16.gmra.mxu0 %v1287
        %v1380 = vpop.f32.mrf.mxu0
        %v1381 = vadd.f32 %v1220, %v1380
        %v1382 = vpop.f32.mrf.mxu0
        %v1383 = vadd.f32 %v1220, %v1382
        %1384 = vmatmul.bf16.gmra.mxu0 %v1288
        %v1385 = vpop.f32.mrf.mxu0
        %v1386 = vadd.f32 %v1220, %v1385
        %v1387 = vpop.f32.mrf.mxu0
        %v1388 = vadd.f32 %v1220, %v1387
        %1389 = vmatmul.bf16.gmra.mxu0 %v1289
        %v1390 = vpop.f32.mrf.mxu0
        %v1391 = vadd.f32 %v1220, %v1390
        %v1392 = vpop.f32.mrf.mxu0
        %v1393 = vadd.f32 %v1220, %v1392
        %1394 = vmatmul.bf16.gmra.mxu0 %v1290
        %v1395 = vpop.f32.mrf.mxu0
        %v1396 = vadd.f32 %v1220, %v1395
        %v1397 = vpop.f32.mrf.mxu0
        %v1398 = vadd.f32 %v1220, %v1397
        %1399 = vmatmul.bf16.gmra.mxu0 %v1291
        %v1400 = vpop.f32.mrf.mxu0
        %v1401 = vadd.f32 %v1220, %v1400
        %v1402 = vpop.f32.mrf.mxu0
        %v1403 = vadd.f32 %v1220, %v1402
        %1404 = vmatmul.bf16.gmra.mxu0 %v1292
        %v1405 = vpop.f32.mrf.mxu0
        %v1406 = vadd.f32 %v1220, %v1405
        %v1407 = vpop.f32.mrf.mxu0
        %v1408 = vadd.f32 %v1220, %v1407
        %1409 = vmatmul.bf16.gmra.mxu0 %v1293
        %v1410 = vpop.f32.mrf.mxu0
        %v1411 = vadd.f32 %v1220, %v1410
        %v1412 = vpop.f32.mrf.mxu0
        %v1413 = vadd.f32 %v1220, %v1412
        %1414 = vmatmul.bf16.gmra.mxu0 %v1294
        %v1415 = vpop.f32.mrf.mxu0
        %v1416 = vadd.f32 %v1220, %v1415
        %v1417 = vpop.f32.mrf.mxu0
        %v1418 = vadd.f32 %v1220, %v1417
        %1419 = vmatmul.bf16.gmra.mxu0 %v1295
        %v1420 = vpop.f32.mrf.mxu0
        %v1421 = vadd.f32 %v1220, %v1420
        %v1422 = vpop.f32.mrf.mxu0
        %v1423 = vadd.f32 %v1220, %v1422
        %1424 = vmatmul.bf16.gmra.mxu0 %v1296
        %v1425 = vpop.f32.mrf.mxu0
        %v1426 = vadd.f32 %v1220, %v1425
        %v1427 = vpop.f32.mrf.mxu0
        %v1428 = vadd.f32 %v1220, %v1427
        %1429 = vmatmul.bf16.gmra.mxu0 %v1297
        %v1430 = vpop.f32.mrf.mxu0
        %v1431 = vadd.f32 %v1220, %v1430
        %v1432 = vpop.f32.mrf.mxu0
        %v1433 = vadd.f32 %v1220, %v1432
        %1434 = vmatmul.bf16.gmra.mxu0 %v1298
        %v1435 = vpop.f32.mrf.mxu0
        %v1436 = vadd.f32 %v1220, %v1435
        %v1437 = vpop.f32.mrf.mxu0
        %v1438 = vadd.f32 %v1220, %v1437
        %1439 = vmatmul.bf16.gmra.mxu0 %v1299
        %v1440 = vpop.f32.mrf.mxu0
        %v1441 = vadd.f32 %v1220, %v1440
        %v1442 = vpop.f32.mrf.mxu0
        %v1443 = vadd.f32 %v1220, %v1442
        %1444 = vmatmul.bf16.gmra.mxu0 %v1300
        %v1445 = vpop.f32.mrf.mxu0
        %v1446 = vadd.f32 %v1220, %v1445
        %v1447 = vpop.f32.mrf.mxu0
        %v1448 = vadd.f32 %v1220, %v1447
        %1449 = vmatmul.bf16.gmra.mxu0 %v1301
        %v1450 = vpop.f32.mrf.mxu0
        %v1451 = vadd.f32 %v1220, %v1450
        %v1452 = vpop.f32.mrf.mxu0
        %v1453 = vadd.f32 %v1220, %v1452
        %1454 = vdwg.mxu0
        %v1455 = vpack.c.bf16 %v870, %v870
        %v1456 = vpack.c.bf16 %v872, %v872
        %v1457 = vpack.c.bf16 %v875, %v875
        %v1458 = vpack.c.bf16 %v877, %v877
        %v1459 = vpack.c.bf16 %v880, %v880
        %v1460 = vpack.c.bf16 %v882, %v882
        %v1461 = vpack.c.bf16 %v885, %v885
        %v1462 = vpack.c.bf16 %v887, %v887
        %v1463 = vpack.c.bf16 %v890, %v890
        %v1464 = vpack.c.bf16 %v892, %v892
        %v1465 = vpack.c.bf16 %v895, %v895
        %v1466 = vpack.c.bf16 %v897, %v897
        %v1467 = vpack.c.bf16 %v900, %v900
        %v1468 = vpack.c.bf16 %v902, %v902
        %v1469 = vpack.c.bf16 %v905, %v905
        %v1470 = vpack.c.bf16 %v907, %v907
        %v1471 = vpack.c.bf16 %v910, %v910
        %v1472 = vpack.c.bf16 %v912, %v912
        %v1473 = vpack.c.bf16 %v915, %v915
        %v1474 = vpack.c.bf16 %v917, %v917
        %v1475 = vpack.c.bf16 %v920, %v920
        %v1476 = vpack.c.bf16 %v922, %v922
        %v1477 = vpack.c.bf16 %v925, %v925
        %v1478 = vpack.c.bf16 %v927, %v927
        %v1479 = vpack.c.bf16 %v930, %v930
        %v1480 = vpack.c.bf16 %v932, %v932
        %v1481 = vpack.c.bf16 %v935, %v935
        %v1482 = vpack.c.bf16 %v937, %v937
        %v1483 = vpack.c.bf16 %v940, %v940
        %v1484 = vpack.c.bf16 %v942, %v942
        %v1485 = vpack.c.bf16 %v945, %v945
        %v1486 = vpack.c.bf16 %v947, %v947
        %v1487 = vpack.c.bf16 %v1123, %v1123
        %v1488 = vpack.c.bf16 %v1125, %v1125
        %v1489 = vpack.c.bf16 %v1128, %v1128
        %v1490 = vpack.c.bf16 %v1130, %v1130
        %v1491 = vpack.c.bf16 %v1133, %v1133
        %v1492 = vpack.c.bf16 %v1135, %v1135
        %v1493 = vpack.c.bf16 %v1138, %v1138
        %v1494 = vpack.c.bf16 %v1140, %v1140
        %v1495 = vpack.c.bf16 %v1143, %v1143
        %v1496 = vpack.c.bf16 %v1145, %v1145
        %v1497 = vpack.c.bf16 %v1148, %v1148
        %v1498 = vpack.c.bf16 %v1150, %v1150
        %v1499 = vpack.c.bf16 %v1153, %v1153
        %v1500 = vpack.c.bf16 %v1155, %v1155
        %v1501 = vpack.c.bf16 %v1158, %v1158
        %v1502 = vpack.c.bf16 %v1160, %v1160
        %v1503 = vpack.c.bf16 %v1163, %v1163
        %v1504 = vpack.c.bf16 %v1165, %v1165
        %v1505 = vpack.c.bf16 %v1168, %v1168
        %v1506 = vpack.c.bf16 %v1170, %v1170
        %v1507 = vpack.c.bf16 %v1173, %v1173
        %v1508 = vpack.c.bf16 %v1175, %v1175
        %v1509 = vpack.c.bf16 %v1178, %v1178
        %v1510 = vpack.c.bf16 %v1180, %v1180
        %v1511 = vpack.c.bf16 %v1183, %v1183
        %v1512 = vpack.c.bf16 %v1185, %v1185
        %v1513 = vpack.c.bf16 %v1188, %v1188
        %v1514 = vpack.c.bf16 %v1190, %v1190
        %v1515 = vpack.c.bf16 %v1193, %v1193
        %v1516 = vpack.c.bf16 %v1195, %v1195
        %v1517 = vpack.c.bf16 %v1198, %v1198
        %v1518 = vpack.c.bf16 %v1200, %v1200
        %v1519 = vld [vmem:[%s519] sm:$0xf]
        %v1520 = vld [vmem:[%s519 + $0x4] sm:$0xf]
        %v1521 = vld [vmem:[%s519 + $0x8] sm:$0xf]
        %v1522 = vld [vmem:[%s519 + $0xc] sm:$0xf]
        %v1523 = vld [vmem:[%s519 + $0x10] sm:$0xf]
        %v1524 = vld [vmem:[%s519 + $0x14] sm:$0xf]
        %v1525 = vld [vmem:[%s519 + $0x18] sm:$0xf]
        %v1526 = vld [vmem:[%s519 + $0x1c] sm:$0xf]
        %v1527 = vld [vmem:[%s519 + $0x20] sm:$0xf]
        %v1528 = vld [vmem:[%s519 + $0x24] sm:$0xf]
        %v1529 = vld [vmem:[%s519 + $0x28] sm:$0xf]
        %v1530 = vld [vmem:[%s519 + $0x2c] sm:$0xf]
        %v1531 = vld [vmem:[%s519 + $0x30] sm:$0xf]
        %v1532 = vld [vmem:[%s519 + $0x34] sm:$0xf]
        %v1533 = vld [vmem:[%s519 + $0x38] sm:$0xf]
        %v1534 = vld [vmem:[%s519 + $0x3c] sm:$0xf]
        %v1535 = vld [vmem:[%s519 + $0x40] sm:$0xf]
        %v1536 = vld [vmem:[%s519 + $0x44] sm:$0xf]
        %v1537 = vld [vmem:[%s519 + $0x48] sm:$0xf]
        %v1538 = vld [vmem:[%s519 + $0x4c] sm:$0xf]
        %v1539 = vld [vmem:[%s519 + $0x50] sm:$0xf]
        %v1540 = vld [vmem:[%s519 + $0x54] sm:$0xf]
        %v1541 = vld [vmem:[%s519 + $0x58] sm:$0xf]
        %v1542 = vld [vmem:[%s519 + $0x5c] sm:$0xf]
        %v1543 = vld [vmem:[%s519 + $0x60] sm:$0xf]
        %v1544 = vld [vmem:[%s519 + $0x64] sm:$0xf]
        %v1545 = vld [vmem:[%s519 + $0x68] sm:$0xf]
        %v1546 = vld [vmem:[%s519 + $0x6c] sm:$0xf]
        %v1547 = vld [vmem:[%s519 + $0x70] sm:$0xf]
        %v1548 = vld [vmem:[%s519 + $0x74] sm:$0xf]
        %v1549 = vld [vmem:[%s519 + $0x78] sm:$0xf]
        %v1550 = vld [vmem:[%s519 + $0x7c] sm:$0xf]
        %v1551 = vunpack.c.l.bf16 %v1519
        %v1552 = vunpack.c.l.bf16 %v1520
        %v1553 = vunpack.c.l.bf16 %v1521
        %v1554 = vunpack.c.l.bf16 %v1522
        %v1555 = vunpack.c.l.bf16 %v1523
        %v1556 = vunpack.c.l.bf16 %v1524
        %v1557 = vunpack.c.l.bf16 %v1525
        %v1558 = vunpack.c.l.bf16 %v1526
        %v1559 = vunpack.c.l.bf16 %v1527
        %v1560 = vunpack.c.l.bf16 %v1528
        %v1561 = vunpack.c.l.bf16 %v1529
        %v1562 = vunpack.c.l.bf16 %v1530
        %v1563 = vunpack.c.l.bf16 %v1531
        %v1564 = vunpack.c.l.bf16 %v1532
        %v1565 = vunpack.c.l.bf16 %v1533
        %v1566 = vunpack.c.l.bf16 %v1534
        %v1567 = vunpack.c.l.bf16 %v1535
        %v1568 = vunpack.c.l.bf16 %v1536
        %v1569 = vunpack.c.l.bf16 %v1537
        %v1570 = vunpack.c.l.bf16 %v1538
        %v1571 = vunpack.c.l.bf16 %v1539
        %v1572 = vunpack.c.l.bf16 %v1540
        %v1573 = vunpack.c.l.bf16 %v1541
        %v1574 = vunpack.c.l.bf16 %v1542
        %v1575 = vunpack.c.l.bf16 %v1543
        %v1576 = vunpack.c.l.bf16 %v1544
        %v1577 = vunpack.c.l.bf16 %v1545
        %v1578 = vunpack.c.l.bf16 %v1546
        %v1579 = vunpack.c.l.bf16 %v1547
        %v1580 = vunpack.c.l.bf16 %v1548
        %v1581 = vunpack.c.l.bf16 %v1549
        %v1582 = vunpack.c.l.bf16 %v1550
        %v1599 = vunpack.c.l.b16 %v1455
        %v1600 = vunpack.c.l.b16 %v1456
        %v1601 = vunpack.c.l.b16 %v1457
        %v1602 = vunpack.c.l.b16 %v1458
        %v1603 = vunpack.c.l.b16 %v1459
        %v1604 = vunpack.c.l.b16 %v1460
        %v1605 = vunpack.c.l.b16 %v1461
        %v1606 = vunpack.c.l.b16 %v1462
        %v1607 = vunpack.c.l.b16 %v1463
        %v1608 = vunpack.c.l.b16 %v1464
        %v1609 = vunpack.c.l.b16 %v1465
        %v1610 = vunpack.c.l.b16 %v1466
        %v1611 = vunpack.c.l.b16 %v1467
        %v1612 = vunpack.c.l.b16 %v1468
        %v1613 = vunpack.c.l.b16 %v1469
        %v1614 = vunpack.c.l.b16 %v1470
        %v1615 = vpack.c.b16 %v1600, %v1599
        %v1616 = vpack.c.b16 %v1602, %v1601
        %v1617 = vpack.c.b16 %v1604, %v1603
        %v1618 = vpack.c.b16 %v1606, %v1605
        %v1619 = vpack.c.b16 %v1608, %v1607
        %v1620 = vpack.c.b16 %v1610, %v1609
        %v1621 = vpack.c.b16 %v1612, %v1611
        %v1622 = vpack.c.b16 %v1614, %v1613
        %v1647 = vunpack.c.l.b16 %v1487
        %v1648 = vunpack.c.l.b16 %v1488
        %v1649 = vunpack.c.l.b16 %v1489
        %v1650 = vunpack.c.l.b16 %v1490
        %v1651 = vunpack.c.l.b16 %v1491
        %v1652 = vunpack.c.l.b16 %v1492
        %v1653 = vunpack.c.l.b16 %v1493
        %v1654 = vunpack.c.l.b16 %v1494
        %v1655 = vunpack.c.l.b16 %v1495
        %v1656 = vunpack.c.l.b16 %v1496
        %v1657 = vunpack.c.l.b16 %v1497
        %v1658 = vunpack.c.l.b16 %v1498
        %v1659 = vunpack.c.l.b16 %v1499
        %v1660 = vunpack.c.l.b16 %v1500
        %v1661 = vunpack.c.l.b16 %v1501
        %v1662 = vunpack.c.l.b16 %v1502
        %v1663 = vpack.c.b16 %v1648, %v1647
        %v1664 = vpack.c.b16 %v1650, %v1649
        %v1665 = vpack.c.b16 %v1652, %v1651
        %v1666 = vpack.c.b16 %v1654, %v1653
        %v1667 = vpack.c.b16 %v1656, %v1655
        %v1668 = vpack.c.b16 %v1658, %v1657
        %v1669 = vpack.c.b16 %v1660, %v1659
        %v1670 = vpack.c.b16 %v1662, %v1661
        %1679 = vmatpush.bf16.xpose.msra.mxu0 %v1670
        %1680 = vmatpush.bf16.xpose.msra.mxu0 %v1669
        %1681 = vmatpush.bf16.xpose.msra.mxu0 %v1668
        %1682 = vmatpush.bf16.xpose.msra.mxu0 %v1667
        %1683 = vmatpush.bf16.xpose.msra.mxu0 %v1666
        %1684 = vmatpush.bf16.xpose.msra.mxu0 %v1665
        %1685 = vmatpush.bf16.xpose.msra.mxu0 %v1664
        %1686 = vmatpush.bf16.xpose.msra.mxu0 %v1663
        %1687 = vmatmul.bf16.gmra.mxu0 %v1615
        %v1688 = vpop.f32.mrf.mxu0
        %v1689 = vadd.f32 %v1551, %v1688
        %v1690 = vpop.f32.mrf.mxu0
        %v1691 = vadd.f32 %v1552, %v1690
        %1692 = vmatmul.bf16.gmra.mxu0 %v1616
        %v1693 = vpop.f32.mrf.mxu0
        %v1694 = vadd.f32 %v1553, %v1693
        %v1695 = vpop.f32.mrf.mxu0
        %v1696 = vadd.f32 %v1554, %v1695
        %1697 = vmatmul.bf16.gmra.mxu0 %v1617
        %v1698 = vpop.f32.mrf.mxu0
        %v1699 = vadd.f32 %v1555, %v1698
        %v1700 = vpop.f32.mrf.mxu0
        %v1701 = vadd.f32 %v1556, %v1700
        %1702 = vmatmul.bf16.gmra.mxu0 %v1618
        %v1703 = vpop.f32.mrf.mxu0
        %v1704 = vadd.f32 %v1557, %v1703
        %v1705 = vpop.f32.mrf.mxu0
        %v1706 = vadd.f32 %v1558, %v1705
        %1707 = vmatmul.bf16.gmra.mxu0 %v1619
        %v1708 = vpop.f32.mrf.mxu0
        %v1709 = vadd.f32 %v1559, %v1708
        %v1710 = vpop.f32.mrf.mxu0
        %v1711 = vadd.f32 %v1560, %v1710
        %1712 = vmatmul.bf16.gmra.mxu0 %v1620
        %v1713 = vpop.f32.mrf.mxu0
        %v1714 = vadd.f32 %v1561, %v1713
        %v1715 = vpop.f32.mrf.mxu0
        %v1716 = vadd.f32 %v1562, %v1715
        %1717 = vmatmul.bf16.gmra.mxu0 %v1621
        %v1718 = vpop.f32.mrf.mxu0
        %v1719 = vadd.f32 %v1563, %v1718
        %v1720 = vpop.f32.mrf.mxu0
        %v1721 = vadd.f32 %v1564, %v1720
        %1722 = vmatmul.bf16.gmra.mxu0 %v1622
        %v1723 = vpop.f32.mrf.mxu0
        %v1724 = vadd.f32 %v1565, %v1723
        %v1725 = vpop.f32.mrf.mxu0
        %v1726 = vadd.f32 %v1566, %v1725
        %1727 = vdwg.mxu0
        %v1744 = vunpack.c.l.b16 %v1471
        %v1745 = vunpack.c.l.b16 %v1472
        %v1746 = vunpack.c.l.b16 %v1473
        %v1747 = vunpack.c.l.b16 %v1474
        %v1748 = vunpack.c.l.b16 %v1475
        %v1749 = vunpack.c.l.b16 %v1476
        %v1750 = vunpack.c.l.b16 %v1477
        %v1751 = vunpack.c.l.b16 %v1478
        %v1752 = vunpack.c.l.b16 %v1479
        %v1753 = vunpack.c.l.b16 %v1480
        %v1754 = vunpack.c.l.b16 %v1481
        %v1755 = vunpack.c.l.b16 %v1482
        %v1756 = vunpack.c.l.b16 %v1483
        %v1757 = vunpack.c.l.b16 %v1484
        %v1758 = vunpack.c.l.b16 %v1485
        %v1759 = vunpack.c.l.b16 %v1486
        %v1760 = vpack.c.b16 %v1745, %v1744
        %v1761 = vpack.c.b16 %v1747, %v1746
        %v1762 = vpack.c.b16 %v1749, %v1748
        %v1763 = vpack.c.b16 %v1751, %v1750
        %v1764 = vpack.c.b16 %v1753, %v1752
        %v1765 = vpack.c.b16 %v1755, %v1754
        %v1766 = vpack.c.b16 %v1757, %v1756
        %v1767 = vpack.c.b16 %v1759, %v1758
        %v1792 = vunpack.c.l.b16 %v1503
        %v1793 = vunpack.c.l.b16 %v1504
        %v1794 = vunpack.c.l.b16 %v1505
        %v1795 = vunpack.c.l.b16 %v1506
        %v1796 = vunpack.c.l.b16 %v1507
        %v1797 = vunpack.c.l.b16 %v1508
        %v1798 = vunpack.c.l.b16 %v1509
        %v1799 = vunpack.c.l.b16 %v1510
        %v1800 = vunpack.c.l.b16 %v1511
        %v1801 = vunpack.c.l.b16 %v1512
        %v1802 = vunpack.c.l.b16 %v1513
        %v1803 = vunpack.c.l.b16 %v1514
        %v1804 = vunpack.c.l.b16 %v1515
        %v1805 = vunpack.c.l.b16 %v1516
        %v1806 = vunpack.c.l.b16 %v1517
        %v1807 = vunpack.c.l.b16 %v1518
        %v1808 = vpack.c.b16 %v1793, %v1792
        %v1809 = vpack.c.b16 %v1795, %v1794
        %v1810 = vpack.c.b16 %v1797, %v1796
        %v1811 = vpack.c.b16 %v1799, %v1798
        %v1812 = vpack.c.b16 %v1801, %v1800
        %v1813 = vpack.c.b16 %v1803, %v1802
        %v1814 = vpack.c.b16 %v1805, %v1804
        %v1815 = vpack.c.b16 %v1807, %v1806
        %1824 = vmatpush.bf16.xpose.msra.mxu0 %v1815
        %1825 = vmatpush.bf16.xpose.msra.mxu0 %v1814
        %1826 = vmatpush.bf16.xpose.msra.mxu0 %v1813
        %1827 = vmatpush.bf16.xpose.msra.mxu0 %v1812
        %1828 = vmatpush.bf16.xpose.msra.mxu0 %v1811
        %1829 = vmatpush.bf16.xpose.msra.mxu0 %v1810
        %1830 = vmatpush.bf16.xpose.msra.mxu0 %v1809
        %1831 = vmatpush.bf16.xpose.msra.mxu0 %v1808
        %1832 = vmatmul.bf16.gmra.mxu0 %v1760
        %v1833 = vpop.f32.mrf.mxu0
        %v1834 = vadd.f32 %v1567, %v1833
        %v1835 = vpop.f32.mrf.mxu0
        %v1836 = vadd.f32 %v1568, %v1835
        %1837 = vmatmul.bf16.gmra.mxu0 %v1761
        %v1838 = vpop.f32.mrf.mxu0
        %v1839 = vadd.f32 %v1569, %v1838
        %v1840 = vpop.f32.mrf.mxu0
        %v1841 = vadd.f32 %v1570, %v1840
        %1842 = vmatmul.bf16.gmra.mxu0 %v1762
        %v1843 = vpop.f32.mrf.mxu0
        %v1844 = vadd.f32 %v1571, %v1843
        %v1845 = vpop.f32.mrf.mxu0
        %v1846 = vadd.f32 %v1572, %v1845
        %1847 = vmatmul.bf16.gmra.mxu0 %v1763
        %v1848 = vpop.f32.mrf.mxu0
        %v1849 = vadd.f32 %v1573, %v1848
        %v1850 = vpop.f32.mrf.mxu0
        %v1851 = vadd.f32 %v1574, %v1850
        %1852 = vmatmul.bf16.gmra.mxu0 %v1764
        %v1853 = vpop.f32.mrf.mxu0
        %v1854 = vadd.f32 %v1575, %v1853
        %v1855 = vpop.f32.mrf.mxu0
        %v1856 = vadd.f32 %v1576, %v1855
        %1857 = vmatmul.bf16.gmra.mxu0 %v1765
        %v1858 = vpop.f32.mrf.mxu0
        %v1859 = vadd.f32 %v1577, %v1858
        %v1860 = vpop.f32.mrf.mxu0
        %v1861 = vadd.f32 %v1578, %v1860
        %1862 = vmatmul.bf16.gmra.mxu0 %v1766
        %v1863 = vpop.f32.mrf.mxu0
        %v1864 = vadd.f32 %v1579, %v1863
        %v1865 = vpop.f32.mrf.mxu0
        %v1866 = vadd.f32 %v1580, %v1865
        %1867 = vmatmul.bf16.gmra.mxu0 %v1767
        %v1868 = vpop.f32.mrf.mxu0
        %v1869 = vadd.f32 %v1581, %v1868
        %v1870 = vpop.f32.mrf.mxu0
        %v1871 = vadd.f32 %v1582, %v1870
        %1872 = vdwg.mxu0
        %1873 = vmax.xlane.f32.xlu0 %v1689
        %v1874 = vpop.xlane.xlu0 %1873
        %1875 = vmax.xlane.f32.xlu0 %v1691
        %v1876 = vpop.xlane.xlu0 %1875
        %1877 = vmax.xlane.f32.xlu0 %v1694
        %v1878 = vpop.xlane.xlu0 %1877
        %1879 = vmax.xlane.f32.xlu0 %v1696
        %v1880 = vpop.xlane.xlu0 %1879
        %1881 = vmax.xlane.f32.xlu0 %v1699
        %v1882 = vpop.xlane.xlu0 %1881
        %1883 = vmax.xlane.f32.xlu0 %v1701
        %v1884 = vpop.xlane.xlu0 %1883
        %1885 = vmax.xlane.f32.xlu0 %v1704
        %v1886 = vpop.xlane.xlu0 %1885
        %1887 = vmax.xlane.f32.xlu0 %v1706
        %v1888 = vpop.xlane.xlu0 %1887
        %1889 = vmax.xlane.f32.xlu0 %v1709
        %v1890 = vpop.xlane.xlu0 %1889
        %1891 = vmax.xlane.f32.xlu0 %v1711
        %v1892 = vpop.xlane.xlu0 %1891
        %1893 = vmax.xlane.f32.xlu0 %v1714
        %v1894 = vpop.xlane.xlu0 %1893
        %1895 = vmax.xlane.f32.xlu0 %v1716
        %v1896 = vpop.xlane.xlu0 %1895
        %1897 = vmax.xlane.f32.xlu0 %v1719
        %v1898 = vpop.xlane.xlu0 %1897
        %1899 = vmax.xlane.f32.xlu0 %v1721
        %v1900 = vpop.xlane.xlu0 %1899
        %1901 = vmax.xlane.f32.xlu0 %v1724
        %v1902 = vpop.xlane.xlu0 %1901
        %1903 = vmax.xlane.f32.xlu0 %v1726
        %v1904 = vpop.xlane.xlu0 %1903
        %1905 = vmax.xlane.f32.xlu0 %v1834
        %v1906 = vpop.xlane.xlu0 %1905
        %1907 = vmax.xlane.f32.xlu0 %v1836
        %v1908 = vpop.xlane.xlu0 %1907
        %1909 = vmax.xlane.f32.xlu0 %v1839
        %v1910 = vpop.xlane.xlu0 %1909
        %1911 = vmax.xlane.f32.xlu0 %v1841
        %v1912 = vpop.xlane.xlu0 %1911
        %1913 = vmax.xlane.f32.xlu0 %v1844
        %v1914 = vpop.xlane.xlu0 %1913
        %1915 = vmax.xlane.f32.xlu0 %v1846
        %v1916 = vpop.xlane.xlu0 %1915
        %1917 = vmax.xlane.f32.xlu0 %v1849
        %v1918 = vpop.xlane.xlu0 %1917
        %1919 = vmax.xlane.f32.xlu0 %v1851
        %v1920 = vpop.xlane.xlu0 %1919
        %1921 = vmax.xlane.f32.xlu0 %v1854
        %v1922 = vpop.xlane.xlu0 %1921
        %1923 = vmax.xlane.f32.xlu0 %v1856
        %v1924 = vpop.xlane.xlu0 %1923
        %1925 = vmax.xlane.f32.xlu0 %v1859
        %v1926 = vpop.xlane.xlu0 %1925
        %1927 = vmax.xlane.f32.xlu0 %v1861
        %v1928 = vpop.xlane.xlu0 %1927
        %1929 = vmax.xlane.f32.xlu0 %v1864
        %v1930 = vpop.xlane.xlu0 %1929
        %1931 = vmax.xlane.f32.xlu0 %v1866
        %v1932 = vpop.xlane.xlu0 %1931
        %1933 = vmax.xlane.f32.xlu0 %v1869
        %v1934 = vpop.xlane.xlu0 %1933
        %1935 = vmax.xlane.f32.xlu0 %v1871
        %v1936 = vpop.xlane.xlu0 %1935
        %v1937 = vsub.f32 %v1689, %v1874
        %v1938 = vsub.f32 %v1691, %v1876
        %v1939 = vsub.f32 %v1694, %v1878
        %v1940 = vsub.f32 %v1696, %v1880
        %v1941 = vsub.f32 %v1699, %v1882
        %v1942 = vsub.f32 %v1701, %v1884
        %v1943 = vsub.f32 %v1704, %v1886
        %v1944 = vsub.f32 %v1706, %v1888
        %v1945 = vsub.f32 %v1709, %v1890
        %v1946 = vsub.f32 %v1711, %v1892
        %v1947 = vsub.f32 %v1714, %v1894
        %v1948 = vsub.f32 %v1716, %v1896
        %v1949 = vsub.f32 %v1719, %v1898
        %v1950 = vsub.f32 %v1721, %v1900
        %v1951 = vsub.f32 %v1724, %v1902
        %v1952 = vsub.f32 %v1726, %v1904
        %v1953 = vsub.f32 %v1834, %v1906
        %v1954 = vsub.f32 %v1836, %v1908
        %v1955 = vsub.f32 %v1839, %v1910
        %v1956 = vsub.f32 %v1841, %v1912
        %v1957 = vsub.f32 %v1844, %v1914
        %v1958 = vsub.f32 %v1846, %v1916
        %v1959 = vsub.f32 %v1849, %v1918
        %v1960 = vsub.f32 %v1851, %v1920
        %v1961 = vsub.f32 %v1854, %v1922
        %v1962 = vsub.f32 %v1856, %v1924
        %v1963 = vsub.f32 %v1859, %v1926
        %v1964 = vsub.f32 %v1861, %v1928
        %v1965 = vsub.f32 %v1864, %v1930
        %v1966 = vsub.f32 %v1866, %v1932
        %v1967 = vsub.f32 %v1869, %v1934
        %v1968 = vsub.f32 %v1871, %v1936
        %v1969 = vmul.f32 %v1937, 1.442695
        %v1970 = vpow.pop %v1969
        %v1971 = vmul.f32 %v1938, 1.442695
        %v1972 = vpow.pop %v1971
        %v1973 = vmul.f32 %v1939, 1.442695
        %v1974 = vpow.pop %v1973
        %v1975 = vmul.f32 %v1940, 1.442695
        %v1976 = vpow.pop %v1975
        %v1977 = vmul.f32 %v1941, 1.442695
        %v1978 = vpow.pop %v1977
        %v1979 = vmul.f32 %v1942, 1.442695
        %v1980 = vpow.pop %v1979
        %v1981 = vmul.f32 %v1943, 1.442695
        %v1982 = vpow.pop %v1981
        %v1983 = vmul.f32 %v1944, 1.442695
        %v1984 = vpow.pop %v1983
        %v1985 = vmul.f32 %v1945, 1.442695
        %v1986 = vpow.pop %v1985
        %v1987 = vmul.f32 %v1946, 1.442695
        %v1988 = vpow.pop %v1987
        %v1989 = vmul.f32 %v1947, 1.442695
        %v1990 = vpow.pop %v1989
        %v1991 = vmul.f32 %v1948, 1.442695
        %v1992 = vpow.pop %v1991
        %v1993 = vmul.f32 %v1949, 1.442695
        %v1994 = vpow.pop %v1993
        %v1995 = vmul.f32 %v1950, 1.442695
        %v1996 = vpow.pop %v1995
        %v1997 = vmul.f32 %v1951, 1.442695
        %v1998 = vpow.pop %v1997
        %v1999 = vmul.f32 %v1952, 1.442695
        %v2000 = vpow.pop %v1999
        %v2001 = vmul.f32 %v1953, 1.442695
        %v2002 = vpow.pop %v2001
        %v2003 = vmul.f32 %v1954, 1.442695
        %v2004 = vpow.pop %v2003
        %v2005 = vmul.f32 %v1955, 1.442695
        %v2006 = vpow.pop %v2005
        %v2007 = vmul.f32 %v1956, 1.442695
        %v2008 = vpow.pop %v2007
        %v2009 = vmul.f32 %v1957, 1.442695
        %v2010 = vpow.pop %v2009
        %v2011 = vmul.f32 %v1958, 1.442695
        %v2012 = vpow.pop %v2011
        %v2013 = vmul.f32 %v1959, 1.442695
        %v2014 = vpow.pop %v2013
        %v2015 = vmul.f32 %v1960, 1.442695
        %v2016 = vpow.pop %v2015
        %v2017 = vmul.f32 %v1961, 1.442695
        %v2018 = vpow.pop %v2017
        %v2019 = vmul.f32 %v1962, 1.442695
        %v2020 = vpow.pop %v2019
        %v2021 = vmul.f32 %v1963, 1.442695
        %v2022 = vpow.pop %v2021
        %v2023 = vmul.f32 %v1964, 1.442695
        %v2024 = vpow.pop %v2023
        %v2025 = vmul.f32 %v1965, 1.442695
        %v2026 = vpow.pop %v2025
        %v2027 = vmul.f32 %v1966, 1.442695
        %v2028 = vpow.pop %v2027
        %v2029 = vmul.f32 %v1967, 1.442695
        %v2030 = vpow.pop %v2029
        %v2031 = vmul.f32 %v1968, 1.442695
        %v2032 = vpow.pop %v2031
        %2033 = vadd.xlane.f32.xlu0 %v1970
        %v2034 = vpop.xlane.xlu0 %2033
        %2035 = vadd.xlane.f32.xlu0 %v1972
        %v2036 = vpop.xlane.xlu0 %2035
        %2037 = vadd.xlane.f32.xlu0 %v1974
        %v2038 = vpop.xlane.xlu0 %2037
        %2039 = vadd.xlane.f32.xlu0 %v1976
        %v2040 = vpop.xlane.xlu0 %2039
        %2041 = vadd.xlane.f32.xlu0 %v1978
        %v2042 = vpop.xlane.xlu0 %2041
        %2043 = vadd.xlane.f32.xlu0 %v1980
        %v2044 = vpop.xlane.xlu0 %2043
        %2045 = vadd.xlane.f32.xlu0 %v1982
        %v2046 = vpop.xlane.xlu0 %2045
        %2047 = vadd.xlane.f32.xlu0 %v1984
        %v2048 = vpop.xlane.xlu0 %2047
        %2049 = vadd.xlane.f32.xlu0 %v1986
        %v2050 = vpop.xlane.xlu0 %2049
        %2051 = vadd.xlane.f32.xlu0 %v1988
        %v2052 = vpop.xlane.xlu0 %2051
        %2053 = vadd.xlane.f32.xlu0 %v1990
        %v2054 = vpop.xlane.xlu0 %2053
        %2055 = vadd.xlane.f32.xlu0 %v1992
        %v2056 = vpop.xlane.xlu0 %2055
        %2057 = vadd.xlane.f32.xlu0 %v1994
        %v2058 = vpop.xlane.xlu0 %2057
        %2059 = vadd.xlane.f32.xlu0 %v1996
        %v2060 = vpop.xlane.xlu0 %2059
        %2061 = vadd.xlane.f32.xlu0 %v1998
        %v2062 = vpop.xlane.xlu0 %2061
        %2063 = vadd.xlane.f32.xlu0 %v2000
        %v2064 = vpop.xlane.xlu0 %2063
        %2065 = vadd.xlane.f32.xlu0 %v2002
        %v2066 = vpop.xlane.xlu0 %2065
        %2067 = vadd.xlane.f32.xlu0 %v2004
        %v2068 = vpop.xlane.xlu0 %2067
        %2069 = vadd.xlane.f32.xlu0 %v2006
        %v2070 = vpop.xlane.xlu0 %2069
        %2071 = vadd.xlane.f32.xlu0 %v2008
        %v2072 = vpop.xlane.xlu0 %2071
        %2073 = vadd.xlane.f32.xlu0 %v2010
        %v2074 = vpop.xlane.xlu0 %2073
        %2075 = vadd.xlane.f32.xlu0 %v2012
        %v2076 = vpop.xlane.xlu0 %2075
        %2077 = vadd.xlane.f32.xlu0 %v2014
        %v2078 = vpop.xlane.xlu0 %2077
        %2079 = vadd.xlane.f32.xlu0 %v2016
        %v2080 = vpop.xlane.xlu0 %2079
        %2081 = vadd.xlane.f32.xlu0 %v2018
        %v2082 = vpop.xlane.xlu0 %2081
        %2083 = vadd.xlane.f32.xlu0 %v2020
        %v2084 = vpop.xlane.xlu0 %2083
        %2085 = vadd.xlane.f32.xlu0 %v2022
        %v2086 = vpop.xlane.xlu0 %2085
        %2087 = vadd.xlane.f32.xlu0 %v2024
        %v2088 = vpop.xlane.xlu0 %2087
        %2089 = vadd.xlane.f32.xlu0 %v2026
        %v2090 = vpop.xlane.xlu0 %2089
        %2091 = vadd.xlane.f32.xlu0 %v2028
        %v2092 = vpop.xlane.xlu0 %2091
        %2093 = vadd.xlane.f32.xlu0 %v2030
        %v2094 = vpop.xlane.xlu0 %2093
        %2095 = vadd.xlane.f32.xlu0 %v2032
        %v2096 = vpop.xlane.xlu0 %2095
        %v2097 = vrcp.pop %v2034
        %v2098 = vrcp.pop %v2036
        %v2099 = vrcp.pop %v2038
        %v2100 = vrcp.pop %v2040
        %v2101 = vrcp.pop %v2042
        %v2102 = vrcp.pop %v2044
        %v2103 = vrcp.pop %v2046
        %v2104 = vrcp.pop %v2048
        %v2105 = vrcp.pop %v2050
        %v2106 = vrcp.pop %v2052
        %v2107 = vrcp.pop %v2054
        %v2108 = vrcp.pop %v2056
        %v2109 = vrcp.pop %v2058
        %v2110 = vrcp.pop %v2060
        %v2111 = vrcp.pop %v2062
        %v2112 = vrcp.pop %v2064
        %v2113 = vrcp.pop %v2066
        %v2114 = vrcp.pop %v2068
        %v2115 = vrcp.pop %v2070
        %v2116 = vrcp.pop %v2072
        %v2117 = vrcp.pop %v2074
        %v2118 = vrcp.pop %v2076
        %v2119 = vrcp.pop %v2078
        %v2120 = vrcp.pop %v2080
        %v2121 = vrcp.pop %v2082
        %v2122 = vrcp.pop %v2084
        %v2123 = vrcp.pop %v2086
        %v2124 = vrcp.pop %v2088
        %v2125 = vrcp.pop %v2090
        %v2126 = vrcp.pop %v2092
        %v2127 = vrcp.pop %v2094
        %v2128 = vrcp.pop %v2096
        %v2129 = vmul.f32 %v1970, %v2097
        %v2130 = vmul.f32 %v1972, %v2098
        %v2131 = vmul.f32 %v1974, %v2099
        %v2132 = vmul.f32 %v1976, %v2100
        %v2133 = vmul.f32 %v1978, %v2101
        %v2134 = vmul.f32 %v1980, %v2102
        %v2135 = vmul.f32 %v1982, %v2103
        %v2136 = vmul.f32 %v1984, %v2104
        %v2137 = vmul.f32 %v1986, %v2105
        %v2138 = vmul.f32 %v1988, %v2106
        %v2139 = vmul.f32 %v1990, %v2107
        %v2140 = vmul.f32 %v1992, %v2108
        %v2141 = vmul.f32 %v1994, %v2109
        %v2142 = vmul.f32 %v1996, %v2110
        %v2143 = vmul.f32 %v1998, %v2111
        %v2144 = vmul.f32 %v2000, %v2112
        %v2145 = vmul.f32 %v2002, %v2113
        %v2146 = vmul.f32 %v2004, %v2114
        %v2147 = vmul.f32 %v2006, %v2115
        %v2148 = vmul.f32 %v2008, %v2116
        %v2149 = vmul.f32 %v2010, %v2117
        %v2150 = vmul.f32 %v2012, %v2118
        %v2151 = vmul.f32 %v2014, %v2119
        %v2152 = vmul.f32 %v2016, %v2120
        %v2153 = vmul.f32 %v2018, %v2121
        %v2154 = vmul.f32 %v2020, %v2122
        %v2155 = vmul.f32 %v2022, %v2123
        %v2156 = vmul.f32 %v2024, %v2124
        %v2157 = vmul.f32 %v2026, %v2125
        %v2158 = vmul.f32 %v2028, %v2126
        %v2159 = vmul.f32 %v2030, %v2127
        %v2160 = vmul.f32 %v2032, %v2128
        %v2161 = vpack.c.bf16 %v2129, %v2129
        %v2162 = vpack.c.bf16 %v2130, %v2130
        %v2163 = vpack.c.bf16 %v2131, %v2131
        %v2164 = vpack.c.bf16 %v2132, %v2132
        %v2165 = vpack.c.bf16 %v2133, %v2133
        %v2166 = vpack.c.bf16 %v2134, %v2134
        %v2167 = vpack.c.bf16 %v2135, %v2135
        %v2168 = vpack.c.bf16 %v2136, %v2136
        %v2169 = vpack.c.bf16 %v2137, %v2137
        %v2170 = vpack.c.bf16 %v2138, %v2138
        %v2171 = vpack.c.bf16 %v2139, %v2139
        %v2172 = vpack.c.bf16 %v2140, %v2140
        %v2173 = vpack.c.bf16 %v2141, %v2141
        %v2174 = vpack.c.bf16 %v2142, %v2142
        %v2175 = vpack.c.bf16 %v2143, %v2143
        %v2176 = vpack.c.bf16 %v2144, %v2144
        %v2177 = vpack.c.bf16 %v2145, %v2145
        %v2178 = vpack.c.bf16 %v2146, %v2146
        %v2179 = vpack.c.bf16 %v2147, %v2147
        %v2180 = vpack.c.bf16 %v2148, %v2148
        %v2181 = vpack.c.bf16 %v2149, %v2149
        %v2182 = vpack.c.bf16 %v2150, %v2150
        %v2183 = vpack.c.bf16 %v2151, %v2151
        %v2184 = vpack.c.bf16 %v2152, %v2152
        %v2185 = vpack.c.bf16 %v2153, %v2153
        %v2186 = vpack.c.bf16 %v2154, %v2154
        %v2187 = vpack.c.bf16 %v2155, %v2155
        %v2188 = vpack.c.bf16 %v2156, %v2156
        %v2189 = vpack.c.bf16 %v2157, %v2157
        %v2190 = vpack.c.bf16 %v2158, %v2158
        %v2191 = vpack.c.bf16 %v2159, %v2159
        %v2192 = vpack.c.bf16 %v2160, %v2160
        %v2193 = vpack.c.bf16 %v1376, %v1376
        %v2194 = vpack.c.bf16 %v1378, %v1378
        %v2195 = vpack.c.bf16 %v1381, %v1381
        %v2196 = vpack.c.bf16 %v1383, %v1383
        %v2197 = vpack.c.bf16 %v1386, %v1386
        %v2198 = vpack.c.bf16 %v1388, %v1388
        %v2199 = vpack.c.bf16 %v1391, %v1391
        %v2200 = vpack.c.bf16 %v1393, %v1393
        %v2201 = vpack.c.bf16 %v1396, %v1396
        %v2202 = vpack.c.bf16 %v1398, %v1398
        %v2203 = vpack.c.bf16 %v1401, %v1401
        %v2204 = vpack.c.bf16 %v1403, %v1403
        %v2205 = vpack.c.bf16 %v1406, %v1406
        %v2206 = vpack.c.bf16 %v1408, %v1408
        %v2207 = vpack.c.bf16 %v1411, %v1411
        %v2208 = vpack.c.bf16 %v1413, %v1413
        %v2209 = vpack.c.bf16 %v1416, %v1416
        %v2210 = vpack.c.bf16 %v1418, %v1418
        %v2211 = vpack.c.bf16 %v1421, %v1421
        %v2212 = vpack.c.bf16 %v1423, %v1423
        %v2213 = vpack.c.bf16 %v1426, %v1426
        %v2214 = vpack.c.bf16 %v1428, %v1428
        %v2215 = vpack.c.bf16 %v1431, %v1431
        %v2216 = vpack.c.bf16 %v1433, %v1433
        %v2217 = vpack.c.bf16 %v1436, %v1436
        %v2218 = vpack.c.bf16 %v1438, %v1438
        %v2219 = vpack.c.bf16 %v1441, %v1441
        %v2220 = vpack.c.bf16 %v1443, %v1443
        %v2221 = vpack.c.bf16 %v1446, %v1446
        %v2222 = vpack.c.bf16 %v1448, %v1448
        %v2223 = vpack.c.bf16 %v1451, %v1451
        %v2224 = vpack.c.bf16 %v1453, %v1453
        %v2241 = vunpack.c.l.b16 %v2161
        %v2242 = vunpack.c.l.b16 %v2162
        %v2243 = vunpack.c.l.b16 %v2163
        %v2244 = vunpack.c.l.b16 %v2164
        %v2245 = vunpack.c.l.b16 %v2165
        %v2246 = vunpack.c.l.b16 %v2166
        %v2247 = vunpack.c.l.b16 %v2167
        %v2248 = vunpack.c.l.b16 %v2168
        %v2249 = vunpack.c.l.b16 %v2169
        %v2250 = vunpack.c.l.b16 %v2170
        %v2251 = vunpack.c.l.b16 %v2171
        %v2252 = vunpack.c.l.b16 %v2172
        %v2253 = vunpack.c.l.b16 %v2173
        %v2254 = vunpack.c.l.b16 %v2174
        %v2255 = vunpack.c.l.b16 %v2175
        %v2256 = vunpack.c.l.b16 %v2176
        %v2257 = vpack.c.b16 %v2242, %v2241
        %v2258 = vpack.c.b16 %v2244, %v2243
        %v2259 = vpack.c.b16 %v2246, %v2245
        %v2260 = vpack.c.b16 %v2248, %v2247
        %v2261 = vpack.c.b16 %v2250, %v2249
        %v2262 = vpack.c.b16 %v2252, %v2251
        %v2263 = vpack.c.b16 %v2254, %v2253
        %v2264 = vpack.c.b16 %v2256, %v2255
        %v2289 = vunpack.c.l.b16 %v2193
        %v2290 = vunpack.c.l.b16 %v2194
        %v2291 = vunpack.c.l.b16 %v2195
        %v2292 = vunpack.c.l.b16 %v2196
        %v2293 = vunpack.c.l.b16 %v2197
        %v2294 = vunpack.c.l.b16 %v2198
        %v2295 = vunpack.c.l.b16 %v2199
        %v2296 = vunpack.c.l.b16 %v2200
        %v2297 = vunpack.c.l.b16 %v2201
        %v2298 = vunpack.c.l.b16 %v2202
        %v2299 = vunpack.c.l.b16 %v2203
        %v2300 = vunpack.c.l.b16 %v2204
        %v2301 = vunpack.c.l.b16 %v2205
        %v2302 = vunpack.c.l.b16 %v2206
        %v2303 = vunpack.c.l.b16 %v2207
        %v2304 = vunpack.c.l.b16 %v2208
        %v2305 = vpack.c.b16 %v2290, %v2289
        %v2306 = vpack.c.b16 %v2292, %v2291
        %v2307 = vpack.c.b16 %v2294, %v2293
        %v2308 = vpack.c.b16 %v2296, %v2295
        %v2309 = vpack.c.b16 %v2298, %v2297
        %v2310 = vpack.c.b16 %v2300, %v2299
        %v2311 = vpack.c.b16 %v2302, %v2301
        %v2312 = vpack.c.b16 %v2304, %v2303
        %2321 = vmatpush.bf16.msra.mxu0 %v2312
        %2322 = vmatpush.bf16.msra.mxu0 %v2311
        %2323 = vmatpush.bf16.msra.mxu0 %v2310
        %2324 = vmatpush.bf16.msra.mxu0 %v2309
        %2325 = vmatpush.bf16.msra.mxu0 %v2308
        %2326 = vmatpush.bf16.msra.mxu0 %v2307
        %2327 = vmatpush.bf16.msra.mxu0 %v2306
        %2328 = vmatpush.bf16.msra.mxu0 %v2305
        %2329 = vmatmul.bf16.gmra.mxu0 %v2257
        %v2330 = vpop.f32.mrf.mxu0
        %v2331 = vadd.f32 0.0, %v2330
        %v2332 = vpop.f32.mrf.mxu0
        %v2333 = vadd.f32 0.0, %v2332
        %2334 = vmatmul.bf16.gmra.mxu0 %v2258
        %v2335 = vpop.f32.mrf.mxu0
        %v2336 = vadd.f32 0.0, %v2335
        %v2337 = vpop.f32.mrf.mxu0
        %v2338 = vadd.f32 0.0, %v2337
        %2339 = vmatmul.bf16.gmra.mxu0 %v2259
        %v2340 = vpop.f32.mrf.mxu0
        %v2341 = vadd.f32 0.0, %v2340
        %v2342 = vpop.f32.mrf.mxu0
        %v2343 = vadd.f32 0.0, %v2342
        %2344 = vmatmul.bf16.gmra.mxu0 %v2260
        %v2345 = vpop.f32.mrf.mxu0
        %v2346 = vadd.f32 0.0, %v2345
        %v2347 = vpop.f32.mrf.mxu0
        %v2348 = vadd.f32 0.0, %v2347
        %2349 = vmatmul.bf16.gmra.mxu0 %v2261
        %v2350 = vpop.f32.mrf.mxu0
        %v2351 = vadd.f32 0.0, %v2350
        %v2352 = vpop.f32.mrf.mxu0
        %v2353 = vadd.f32 0.0, %v2352
        %2354 = vmatmul.bf16.gmra.mxu0 %v2262
        %v2355 = vpop.f32.mrf.mxu0
        %v2356 = vadd.f32 0.0, %v2355
        %v2357 = vpop.f32.mrf.mxu0
        %v2358 = vadd.f32 0.0, %v2357
        %2359 = vmatmul.bf16.gmra.mxu0 %v2263
        %v2360 = vpop.f32.mrf.mxu0
        %v2361 = vadd.f32 0.0, %v2360
        %v2362 = vpop.f32.mrf.mxu0
        %v2363 = vadd.f32 0.0, %v2362
        %2364 = vmatmul.bf16.gmra.mxu0 %v2264
        %v2365 = vpop.f32.mrf.mxu0
        %v2366 = vadd.f32 0.0, %v2365
        %v2367 = vpop.f32.mrf.mxu0
        %v2368 = vadd.f32 0.0, %v2367
        %2369 = vdwg.mxu0
        %v2386 = vunpack.c.l.b16 %v2177
        %v2387 = vunpack.c.l.b16 %v2178
        %v2388 = vunpack.c.l.b16 %v2179
        %v2389 = vunpack.c.l.b16 %v2180
        %v2390 = vunpack.c.l.b16 %v2181
        %v2391 = vunpack.c.l.b16 %v2182
        %v2392 = vunpack.c.l.b16 %v2183
        %v2393 = vunpack.c.l.b16 %v2184
        %v2394 = vunpack.c.l.b16 %v2185
        %v2395 = vunpack.c.l.b16 %v2186
        %v2396 = vunpack.c.l.b16 %v2187
        %v2397 = vunpack.c.l.b16 %v2188
        %v2398 = vunpack.c.l.b16 %v2189
        %v2399 = vunpack.c.l.b16 %v2190
        %v2400 = vunpack.c.l.b16 %v2191
        %v2401 = vunpack.c.l.b16 %v2192
        %v2402 = vpack.c.b16 %v2387, %v2386
        %v2403 = vpack.c.b16 %v2389, %v2388
        %v2404 = vpack.c.b16 %v2391, %v2390
        %v2405 = vpack.c.b16 %v2393, %v2392
        %v2406 = vpack.c.b16 %v2395, %v2394
        %v2407 = vpack.c.b16 %v2397, %v2396
        %v2408 = vpack.c.b16 %v2399, %v2398
        %v2409 = vpack.c.b16 %v2401, %v2400
        %v2434 = vunpack.c.l.b16 %v2209
        %v2435 = vunpack.c.l.b16 %v2210
        %v2436 = vunpack.c.l.b16 %v2211
        %v2437 = vunpack.c.l.b16 %v2212
        %v2438 = vunpack.c.l.b16 %v2213
        %v2439 = vunpack.c.l.b16 %v2214
        %v2440 = vunpack.c.l.b16 %v2215
        %v2441 = vunpack.c.l.b16 %v2216
        %v2442 = vunpack.c.l.b16 %v2217
        %v2443 = vunpack.c.l.b16 %v2218
        %v2444 = vunpack.c.l.b16 %v2219
        %v2445 = vunpack.c.l.b16 %v2220
        %v2446 = vunpack.c.l.b16 %v2221
        %v2447 = vunpack.c.l.b16 %v2222
        %v2448 = vunpack.c.l.b16 %v2223
        %v2449 = vunpack.c.l.b16 %v2224
        %v2450 = vpack.c.b16 %v2435, %v2434
        %v2451 = vpack.c.b16 %v2437, %v2436
        %v2452 = vpack.c.b16 %v2439, %v2438
        %v2453 = vpack.c.b16 %v2441, %v2440
        %v2454 = vpack.c.b16 %v2443, %v2442
        %v2455 = vpack.c.b16 %v2445, %v2444
        %v2456 = vpack.c.b16 %v2447, %v2446
        %v2457 = vpack.c.b16 %v2449, %v2448
        %2466 = vmatpush.bf16.msra.mxu0 %v2457
        %2467 = vmatpush.bf16.msra.mxu0 %v2456
        %2468 = vmatpush.bf16.msra.mxu0 %v2455
        %2469 = vmatpush.bf16.msra.mxu0 %v2454
        %2470 = vmatpush.bf16.msra.mxu0 %v2453
        %2471 = vmatpush.bf16.msra.mxu0 %v2452
        %2472 = vmatpush.bf16.msra.mxu0 %v2451
        %2473 = vmatpush.bf16.msra.mxu0 %v2450
        %2474 = vmatmul.bf16.gmra.mxu0 %v2402
        %v2475 = vpop.f32.mrf.mxu0
        %v2476 = vadd.f32 0.0, %v2475
        %v2477 = vpop.f32.mrf.mxu0
        %v2478 = vadd.f32 0.0, %v2477
        %2479 = vmatmul.bf16.gmra.mxu0 %v2403
        %v2480 = vpop.f32.mrf.mxu0
        %v2481 = vadd.f32 0.0, %v2480
        %v2482 = vpop.f32.mrf.mxu0
        %v2483 = vadd.f32 0.0, %v2482
        %2484 = vmatmul.bf16.gmra.mxu0 %v2404
        %v2485 = vpop.f32.mrf.mxu0
        %v2486 = vadd.f32 0.0, %v2485
        %v2487 = vpop.f32.mrf.mxu0
        %v2488 = vadd.f32 0.0, %v2487
        %2489 = vmatmul.bf16.gmra.mxu0 %v2405
        %v2490 = vpop.f32.mrf.mxu0
        %v2491 = vadd.f32 0.0, %v2490
        %v2492 = vpop.f32.mrf.mxu0
        %v2493 = vadd.f32 0.0, %v2492
        %2494 = vmatmul.bf16.gmra.mxu0 %v2406
        %v2495 = vpop.f32.mrf.mxu0
        %v2496 = vadd.f32 0.0, %v2495
        %v2497 = vpop.f32.mrf.mxu0
        %v2498 = vadd.f32 0.0, %v2497
        %2499 = vmatmul.bf16.gmra.mxu0 %v2407
        %v2500 = vpop.f32.mrf.mxu0
        %v2501 = vadd.f32 0.0, %v2500
        %v2502 = vpop.f32.mrf.mxu0
        %v2503 = vadd.f32 0.0, %v2502
        %2504 = vmatmul.bf16.gmra.mxu0 %v2408
        %v2505 = vpop.f32.mrf.mxu0
        %v2506 = vadd.f32 0.0, %v2505
        %v2507 = vpop.f32.mrf.mxu0
        %v2508 = vadd.f32 0.0, %v2507
        %2509 = vmatmul.bf16.gmra.mxu0 %v2409
        %v2510 = vpop.f32.mrf.mxu0
        %v2511 = vadd.f32 0.0, %v2510
        %v2512 = vpop.f32.mrf.mxu0
        %v2513 = vadd.f32 0.0, %v2512
        %2514 = vdwg.mxu0
        %2515 = vst [vmem:[%s586] sm:$0xff] %v2331
        %2516 = vst [vmem:[%s586 + $0x8] sm:$0xff] %v2333
        %2517 = vst [vmem:[%s586 + $0x10] sm:$0xff] %v2336
        %2518 = vst [vmem:[%s586 + $0x18] sm:$0xff] %v2338
        %2519 = vst [vmem:[%s586 + $0x20] sm:$0xff] %v2341
        %2520 = vst [vmem:[%s586 + $0x28] sm:$0xff] %v2343
        %2521 = vst [vmem:[%s586 + $0x30] sm:$0xff] %v2346
        %2522 = vst [vmem:[%s586 + $0x38] sm:$0xff] %v2348
        %2523 = vst [vmem:[%s586 + $0x40] sm:$0xff] %v2351
        %2524 = vst [vmem:[%s586 + $0x48] sm:$0xff] %v2353
        %2525 = vst [vmem:[%s586 + $0x50] sm:$0xff] %v2356
        %2526 = vst [vmem:[%s586 + $0x58] sm:$0xff] %v2358
        %2527 = vst [vmem:[%s586 + $0x60] sm:$0xff] %v2361
        %2528 = vst [vmem:[%s586 + $0x68] sm:$0xff] %v2363
        %2529 = vst [vmem:[%s586 + $0x70] sm:$0xff] %v2366
        %2530 = vst [vmem:[%s586 + $0x78] sm:$0xff] %v2368
        %2531 = vst [vmem:[%s586 + $0x80] sm:$0xff] %v2476
        %2532 = vst [vmem:[%s586 + $0x88] sm:$0xff] %v2478
        %2533 = vst [vmem:[%s586 + $0x90] sm:$0xff] %v2481
        %2534 = vst [vmem:[%s586 + $0x98] sm:$0xff] %v2483
        %2535 = vst [vmem:[%s586 + $0xa0] sm:$0xff] %v2486
        %2536 = vst [vmem:[%s586 + $0xa8] sm:$0xff] %v2488
        %2537 = vst [vmem:[%s586 + $0xb0] sm:$0xff] %v2491
        %2538 = vst [vmem:[%s586 + $0xb8] sm:$0xff] %v2493
        %2539 = vst [vmem:[%s586 + $0xc0] sm:$0xff] %v2496
        %2540 = vst [vmem:[%s586 + $0xc8] sm:$0xff] %v2498
        %2541 = vst [vmem:[%s586 + $0xd0] sm:$0xff] %v2501
        %2542 = vst [vmem:[%s586 + $0xd8] sm:$0xff] %v2503
        %2543 = vst [vmem:[%s586 + $0xe0] sm:$0xff] %v2506
        %2544 = vst [vmem:[%s586 + $0xe8] sm:$0xff] %v2508
        %2545 = vst [vmem:[%s586 + $0xf0] sm:$0xff] %v2511
        %2546 = vst [vmem:[%s586 + $0xf8] sm:$0xff] %v2513
        %2547 = vst [vmem:[%s593] sm:$0xff] %v2129
        %2548 = vst [vmem:[%s593 + $0x8] sm:$0xff] %v2130
        %2549 = vst [vmem:[%s593 + $0x10] sm:$0xff] %v2131
        %2550 = vst [vmem:[%s593 + $0x18] sm:$0xff] %v2132
        %2551 = vst [vmem:[%s593 + $0x20] sm:$0xff] %v2133
        %2552 = vst [vmem:[%s593 + $0x28] sm:$0xff] %v2134
        %2553 = vst [vmem:[%s593 + $0x30] sm:$0xff] %v2135
        %2554 = vst [vmem:[%s593 + $0x38] sm:$0xff] %v2136
        %2555 = vst [vmem:[%s593 + $0x40] sm:$0xff] %v2137
        %2556 = vst [vmem:[%s593 + $0x48] sm:$0xff] %v2138
        %2557 = vst [vmem:[%s593 + $0x50] sm:$0xff] %v2139
        %2558 = vst [vmem:[%s593 + $0x58] sm:$0xff] %v2140
        %2559 = vst [vmem:[%s593 + $0x60] sm:$0xff] %v2141
        %2560 = vst [vmem:[%s593 + $0x68] sm:$0xff] %v2142
        %2561 = vst [vmem:[%s593 + $0x70] sm:$0xff] %v2143
        %2562 = vst [vmem:[%s593 + $0x78] sm:$0xff] %v2144
        %2563 = vst [vmem:[%s593 + $0x80] sm:$0xff] %v2145
        %2564 = vst [vmem:[%s593 + $0x88] sm:$0xff] %v2146
        %2565 = vst [vmem:[%s593 + $0x90] sm:$0xff] %v2147
        %2566 = vst [vmem:[%s593 + $0x98] sm:$0xff] %v2148
        %2567 = vst [vmem:[%s593 + $0xa0] sm:$0xff] %v2149
        %2568 = vst [vmem:[%s593 + $0xa8] sm:$0xff] %v2150
        %2569 = vst [vmem:[%s593 + $0xb0] sm:$0xff] %v2151
        %2570 = vst [vmem:[%s593 + $0xb8] sm:$0xff] %v2152
        %2571 = vst [vmem:[%s593 + $0xc0] sm:$0xff] %v2153
        %2572 = vst [vmem:[%s593 + $0xc8] sm:$0xff] %v2154
        %2573 = vst [vmem:[%s593 + $0xd0] sm:$0xff] %v2155
        %2574 = vst [vmem:[%s593 + $0xd8] sm:$0xff] %v2156
        %2575 = vst [vmem:[%s593 + $0xe0] sm:$0xff] %v2157
        %2576 = vst [vmem:[%s593 + $0xe8] sm:$0xff] %v2158
        %2577 = vst [vmem:[%s593 + $0xf0] sm:$0xff] %v2159
        %2578 = vst [vmem:[%s593 + $0xf8] sm:$0xff] %v2160
        %s2579 = sand.u32 %s277, 1
        %s2580 = scalar_lea.sflag [#allocation4], %s2579
        %s2581 = sand.u32 %s277, 1
        %s2582 = smul.addr %s2581, 256
        %s2583 = scalar_lea.vmem [#allocation14], %s2582
        %s2584 = sand.u32 %s303, 1
        %s2585 = scalar_lea.sflag [#allocation16], %s2584
        %s2586 = sand.u32 %s303, 1
        %s2587 = smul.addr %s2586, 256
        %s2588 = scalar_lea.vmem [#allocation15], %s2587
        // Predicated region
        $region89: #{tpu_custom_call.1} parent=59 // pred_check
          %p2589 = pneg %p287
        $region90: #{tpu_custom_call.1} parent=59 // pred_check_branch
          %2591 = sbr.rel (%p2589) target = $region92
        $region91: #{tpu_custom_call.1} parent=59 // pred_region
          %s2592 = smul.u32 2, %s39
          %2594 = vsyncadd %s2580, 0
          %s2595 = smul.addr %s2592, 16
          %s2596 = smul.addr %s2595, 8
          %s2597 = scalar_lea.hbm %s10, %s2596
          %s2598 = sshll.u32 %s2583, 4
          %s2599 = int_to_ptr.vmem [resolvable:$true] %s2598
          %s2600 = sshll.u32 %s2597, 4
          %s2601 = int_to_ptr.hbm [resolvable:$true] %s2600
          %2606 = dma.vmem_to_hbm [thread:$0]  %s2599, 4096, %s2601, %s2580, 128, 128, 8
        $region92: #{tpu_custom_call.1} parent=59 // pred_fallthru
          _
        // Predicated region
        $region93: #{tpu_custom_call.1} parent=59 // pred_check
          %p2607 = pneg %p313
        $region94: #{tpu_custom_call.1} parent=59 // pred_check_branch
          %2609 = sbr.rel (%p2607) target = $region96
        $region95: #{tpu_custom_call.1} parent=59 // pred_region
          %s2610 = smul.u32 2, %s39
          %2612 = vsyncadd %s2585, 0
          %s2613 = smul.addr %s2610, 16
          %s2614 = smul.addr %s2613, 8
          %s2615 = scalar_lea.hbm %s11, %s2614
          %s2616 = sshll.u32 %s2588, 4
          %s2617 = int_to_ptr.vmem [resolvable:$true] %s2616
          %s2618 = sshll.u32 %s2615, 4
          %s2619 = int_to_ptr.hbm [resolvable:$true] %s2618
          %2624 = dma.vmem_to_hbm [thread:$0]  %s2617, 4096, %s2619, %s2585, 128, 128, 8
        $region96: #{tpu_custom_call.1} parent=59 // pred_fallthru
          _
      $region60: #{tpu_custom_call.1} parent=5 // pred_fallthru
        _
      %p2625 = scmp.le.s32.totalorder 2, %s34
      // Predicated region
      $region97: #{tpu_custom_call.1} parent=5 // pred_check
        %p2626 = pneg %p2625
      $region98: #{tpu_custom_call.1} parent=5 // pred_check_branch
        %2628 = sbr.rel (%p2626) target = $region100
      $region99: #{tpu_custom_call.1} parent=5 // pred_region
        %s2629 = ssub.s32 %s34, 2
        // Predicated region
        $region101: #{tpu_custom_call.1} parent=99 // pred_check
          %p2630 = pneg %p293
        $region102: #{tpu_custom_call.1} parent=99 // pred_check_branch
          %2632 = sbr.rel (%p2630) target = $region104
        $region103: #{tpu_custom_call.1} parent=99 // pred_region
          %s2633 = sand.u32 %s278, 1
          %s2634 = scalar_lea.sflag [#allocation4], %s2633
          %s2635 = sand.u32 %s278, 1
          %s2636 = smul.addr %s2635, 256
          %s2637 = scalar_lea.vmem [#allocation14], %s2636
          %2639 = dma.done %s2634, 4096
        $region104: #{tpu_custom_call.1} parent=99 // pred_fallthru
          _
        // Predicated region
        $region105: #{tpu_custom_call.1} parent=99 // pred_check
          %p2640 = pneg %p319
        $region106: #{tpu_custom_call.1} parent=99 // pred_check_branch
          %2642 = sbr.rel (%p2640) target = $region108
        $region107: #{tpu_custom_call.1} parent=99 // pred_region
          %s2643 = sand.u32 %s304, 1
          %s2644 = scalar_lea.sflag [#allocation16], %s2643
          %s2645 = sand.u32 %s304, 1
          %s2646 = smul.addr %s2645, 256
          %s2647 = scalar_lea.vmem [#allocation15], %s2646
          %2649 = dma.done %s2644, 4096
        $region108: #{tpu_custom_call.1} parent=99 // pred_fallthru
          _
      $region100: #{tpu_custom_call.1} parent=5 // pred_fallthru
        _
    $region6: #{tpu_custom_call.1} parent=1 // loop_footer
      %s38 = sadd.s32 1, %s34
    $region7: #{tpu_custom_call.1} parent=1 // loop_footer_branch
      %33 = sbr.rel target = $region3
    $region8: #{tpu_custom_call.1} parent=1 // loop_exit
      _
    %2650 = vsyncpa [#allocation3], 1
    %s2651 = scalar_lea.sflag [#allocation3], 1
    %2652 = vsyncpa %s2651, 1
    %2653 = vsyncpa [#allocation6], 1
    %s2654 = scalar_lea.sflag [#allocation6], 1
    %2655 = vsyncpa %s2654, 1
    %2656 = vsyncpa [#allocation9], 1
    %s2657 = scalar_lea.sflag [#allocation9], 1
    %2658 = vsyncpa %s2657, 1
    %2659 = vsyncpa [#allocation12], 1
    %2660 = vsyncpa [#allocation4], 1
    %s2661 = scalar_lea.sflag [#allocation4], 1
    %2662 = vsyncpa %s2661, 1
    %2663 = vsyncpa [#allocation16], 1
    %s2664 = scalar_lea.sflag [#allocation16], 1
    %2665 = vsyncpa %s2664, 1

</llo_original>
